<compile_context>
chip_gen: v5e
topology: v5e:2x2
jax: 0.10.0
libtpu: 0.0.40
codegen_flags: <defaults>
</compile_context>

<pallas_src>
import math
import numpy as np
import jax
import jax.numpy as jnp
from jax import lax
from jax.experimental import pallas as pl
from jax.experimental.pallas import tpu as pltpu

# ---- small, module-consistent sizes ------------------------------------------
B = 8                       # batch (= len(cond)); 8 fills the f32 sublanes
D = 128                     # trajectory_dim
H = 128                     # hidden width of the synthetic denoiser model
OBS_DIM = 8
ACT_DIM = 4
COND_DIM = OBS_DIM + ACT_DIM            # self.cond_dim
N_TIMESTEPS = 20
R_INFER = 0.5
N_STEPS = math.ceil(R_INFER * N_TIMESTEPS)   # reverse-time steps actually run
COEF_STRIDE = 8                              # coefficients per step (padded)
PREDICT_EPSILON = True                       # module default
# clip_denoised=False (module default) -> no clamp on x_recon


# ---- diffusion schedule buffers (numpy, matches __init__) ---------------------
def cosine_beta_schedule(timesteps, s=0.008):
    steps = timesteps + 1
    x = np.linspace(0, steps, steps)
    alphas_cumprod = np.cos(((x / steps) + s) / (1 + s) * np.pi * 0.5) ** 2
    alphas_cumprod = alphas_cumprod / alphas_cumprod[0]
    betas = 1.0 - (alphas_cumprod[1:] / alphas_cumprod[:-1])
    return np.clip(betas, 0.0, 0.999)


def make_step_tables(n_timesteps, r_infer):
    """Precompute the flat per-step coefficient table + reversed timestep list."""
    betas = cosine_beta_schedule(n_timesteps).astype(np.float64)
    alphas = 1.0 - betas
    alphas_cumprod = np.cumprod(alphas)
    alphas_cumprod_prev = np.concatenate([np.ones(1), alphas_cumprod[:-1]])
    posterior_variance = betas * (1.0 - alphas_cumprod_prev) / (1.0 - alphas_cumprod)

    sqrt_recip = np.sqrt(1.0 / alphas_cumprod)
    sqrt_recipm1 = np.sqrt(1.0 / alphas_cumprod - 1.0)
    coef1 = betas * np.sqrt(alphas_cumprod_prev) / (1.0 - alphas_cumprod)
    coef2 = (1.0 - alphas_cumprod_prev) * np.sqrt(alphas) / (1.0 - alphas_cumprod)
    log_var = np.log(np.clip(posterior_variance, 1e-20, None))

    # N_timesteps = linspace(0, total-1, N).long(); iterate reversed (as p_sample_loop)
    n = math.ceil(r_infer * n_timesteps)
    sched = np.linspace(0, n_timesteps - 1, n).astype(np.int64)
    ts_rev = sched[::-1].copy()

    coefs = np.zeros((n, COEF_STRIDE), np.float32)
    for s, ti in enumerate(ts_rev):
        nz = 0.0 if ti == 0 else 1.0                       # nonzero_mask
        coefs[s, 0] = sqrt_recip[ti]                       # predict_start coeff on x_t
        coefs[s, 1] = sqrt_recipm1[ti]                     # predict_start coeff on eps
        coefs[s, 2] = coef1[ti]                            # posterior_mean_coef1
        coefs[s, 3] = coef2[ti]                            # posterior_mean_coef2
        coefs[s, 4] = nz * math.exp(0.5 * log_var[ti])     # nonzero_mask * std
    return coefs.reshape(-1), ts_rev


# ---- fused Pallas kernel: full reverse-time p_sample_loop, single invocation --
def _diffusion_loop_kernel(coef_ref,            # SMEM  f32[N_STEPS*COEF_STRIDE]
                           x0_ref,              # VMEM  (B, D)  f32 (cond already applied)
                           cond_ref,            # VMEM  (B, D)  f32 cond padded to D lanes
                           noise_ref,           # VMEM  (N_STEPS, B, D) f32  resident
                           bias1_ref,           # VMEM  (N_STEPS, 1, H) f32  resident
                           w1_ref,              # VMEM  (D, H)  bf16 resident
                           w2_ref,              # VMEM  (H, D)  bf16 resident
                           b2_ref,              # VMEM  (1, D)  f32  resident
                           out_ref):            # VMEM  (B, D)  f32 final sample
    # ---- hoisted loop-invariants (JAX does not CSE broadcast_in_dim) ----------
    lane = lax.broadcasted_iota(jnp.int32, (B, D), 1)
    cond_mask = lane < COND_DIM
    cond = cond_ref[...]
    w1 = w1_ref[...]                  # bf16
    w2 = w2_ref[...]                  # bf16
    b2 = b2_ref[...]                  # f32

    def step(i, x):                   # x: (B, D) f32, carried in vregs
        base = i * COEF_STRIDE
        c_recip   = coef_ref[base + 0]
        c_recipm1 = coef_ref[base + 1]
        c_mean1   = coef_ref[base + 2]
        c_mean2   = coef_ref[base + 3]
        c_noise   = coef_ref[base + 4]    # nonzero_mask * exp(0.5 * posterior_log_var)

        # TODO(synk): real denoiser is an external `model(x, cond, t)`; stand-in here is a
        # small MLP  eps = tanh(x @ W1 + (b1 + t*wt)) @ W2 + b2  with t folded into bias1.
        # bf16 operands -> single MXU pass; f32 accumulation.
        h = jnp.tanh(jnp.dot(x.astype(jnp.bfloat16), w1,
                             preferred_element_type=jnp.float32)
                     + bias1_ref[i])                                   # (B, H) f32
        eps = jnp.dot(h.astype(jnp.bfloat16), w2,
                      preferred_element_type=jnp.float32) + b2         # (B, D) f32

        # predict_start_from_noise (predict_epsilon=True); clip_denoised=False -> no clamp
        x_recon = c_recip * x - c_recipm1 * eps
        # q_posterior mean + reparameterized posterior sample
        mean = c_mean1 * x_recon + c_mean2 * x
        x_new = mean + c_noise * noise_ref[i]
        # apply_conditioning: overwrite the first cond_dim lanes with the conditioning state
        # TODO(synk): external diffuser.apply_conditioning writes per-(time, state) pairs;
        # here it overwrites the first cond_dim entries of each flattened trajectory.
        return jnp.where(cond_mask, cond, x_new)

    x_final = lax.fori_loop(0, N_STEPS, step, x0_ref[...], unroll=True)
    out_ref[...] = x_final            # single HBM writeback


@jax.jit
def conditional_sample_fused(coefs_flat, x0, cond_pad, noise_tab, bias1_tab, w1, w2, b2):
    return pl.pallas_call(
        _diffusion_loop_kernel,
        out_shape=jax.ShapeDtypeStruct((B, D), jnp.float32),
        in_specs=[
            pl.BlockSpec(memory_space=pltpu.MemorySpace.SMEM),   # per-step scalar coeffs
            pl.BlockSpec(memory_space=pltpu.MemorySpace.VMEM),   # x0 (cond applied)
            pl.BlockSpec(memory_space=pltpu.MemorySpace.VMEM),   # cond padded
            pl.BlockSpec(memory_space=pltpu.MemorySpace.VMEM),   # noise table (resident)
            pl.BlockSpec(memory_space=pltpu.MemorySpace.VMEM),   # bias1 table (resident)
            pl.BlockSpec(memory_space=pltpu.MemorySpace.VMEM),   # w1 bf16 (resident)
            pl.BlockSpec(memory_space=pltpu.MemorySpace.VMEM),   # w2 bf16 (resident)
            pl.BlockSpec(memory_space=pltpu.MemorySpace.VMEM),   # b2 (resident)
        ],
        out_specs=pl.BlockSpec(memory_space=pltpu.MemorySpace.VMEM),
    )(coefs_flat, x0, cond_pad, noise_tab, bias1_tab, w1, w2, b2)


# ---- pure-JAX reference (identical precision: bf16 matmul operands, f32 acc) --
def _reference_loop(coefs_np, x0, cond_pad, noise_tab, bias1_tab, w1_bf16, w2_bf16, b2):
    lane = jnp.arange(D)[None, :]
    mask = lane < COND_DIM
    x = x0
    for s in range(N_STEPS):
        c = coefs_np[s * COEF_STRIDE: (s + 1) * COEF_STRIDE]
        h = jnp.tanh(jnp.dot(x.astype(jnp.bfloat16), w1_bf16,
                             preferred_element_type=jnp.float32) + bias1_tab[s])
        eps = jnp.dot(h.astype(jnp.bfloat16), w2_bf16,
                      preferred_element_type=jnp.float32) + b2
        x_recon = float(c[0]) * x - float(c[1]) * eps
        mean = float(c[2]) * x_recon + float(c[3]) * x
        x = mean + float(c[4]) * noise_tab[s]
        x = jnp.where(mask, cond_pad, x)
    return x


# ---- host-side setup: schedule tables, noise, conditioning ---------------------
def conditional_sample(cond_state, params, key, r_infer=R_INFER):
    w1, b1, wt, w2, b2 = params

    coefs_np, ts_rev = make_step_tables(N_TIMESTEPS, r_infer)
    coefs_flat = jnp.asarray(coefs_np, jnp.float32)              # (N_STEPS*8,) -> SMEM

    # per-step denoiser bias row:  b1 + t * wt   -> (N_STEPS, 1, H), resident in VMEM
    ts_rev_f = jnp.asarray(ts_rev.astype(np.float32))            # (N_STEPS,)
    bias1_tab = b1[None, :, :] + ts_rev_f[:, None, None] * wt[None, :, :]

    # x = 0.5 * randn(shape); apply_conditioning once on host (drops in-kernel init branch)
    key, k_x0, k_noise = jax.random.split(key, 3)
    x0 = 0.5 * jax.random.normal(k_x0, (B, D), jnp.float32)
    x0 = x0.at[:, :COND_DIM].set(cond_state[:, :COND_DIM])

    # per-step posterior noise: p_sample uses  noise = 0.5 * randn_like(x)  (resident table)
    noise_tab = 0.5 * jax.random.normal(k_noise, (N_STEPS, B, D), jnp.float32)

    # conditioning padded to full lane width (only first COND_DIM lanes are used)
    cond_pad = jnp.zeros((B, D), jnp.float32).at[:, :COND_DIM].set(cond_state[:, :COND_DIM])

    # bf16 weights: halves weight bytes, single MXU pass (f32 accumulation kept in-kernel)
    w1_bf16 = w1.astype(jnp.bfloat16)
    w2_bf16 = w2.astype(jnp.bfloat16)

    out = conditional_sample_fused(coefs_flat, x0, cond_pad, noise_tab,
                                   bias1_tab, w1_bf16, w2_bf16, b2)
    ref = _reference_loop(coefs_np, x0, cond_pad, noise_tab, bias1_tab,
                          w1_bf16, w2_bf16, b2)
    return out, ref


if __name__ == "__main__":
    key = jax.random.PRNGKey(0)
    k1, k2, k3, kc, kloop = jax.random.split(key, 5)

    # deterministic synthetic denoiser-model parameters
    w1 = jax.random.normal(k1, (D, H), jnp.float32) / math.sqrt(D)
    b1 = jnp.zeros((1, H), jnp.float32)
    wt = jax.random.normal(k2, (1, H), jnp.float32) * 0.01
    w2 = jax.random.normal(k3, (H, D), jnp.float32) / math.sqrt(H)
    b2 = jnp.zeros((1, D), jnp.float32)
    params = (w1, b1, wt, w2, b2)

    # cond: one (time=0, state) conditioning pair per batch element
    cond_state = jax.random.normal(kc, (B, COND_DIM), jnp.float32)

    out, ref = conditional_sample(cond_state, params, kloop)
    out = jax.block_until_ready(out)
    ref = jax.block_until_ready(ref)

    assert out.shape == (B, D) and out.dtype == jnp.float32
    assert bool(jnp.all(jnp.isfinite(out)))
    # conditioning lanes must equal cond_state (apply_conditioning after last step)
    assert bool(jnp.allclose(out[:, :COND_DIM], cond_state, atol=1e-6))
    # fused kernel matches a same-precision pure-JAX reference of the loop
    assert bool(jnp.allclose(out, ref, rtol=3e-2, atol=3e-2))
    print("KERNEL_OK")
</pallas_src>

<mosaic_0001>
module attributes {stable_mosaic.version = 11 : i64} {
  func.func @_diffusion_loop_kernel(%arg0: memref<80xf32, #tpu.memory_space<smem>>, %arg1: memref<8x128xf32, #tpu.memory_space<vmem>>, %arg2: memref<8x128xf32, #tpu.memory_space<vmem>>, %arg3: memref<10x8x128xf32, #tpu.memory_space<vmem>>, %arg4: memref<10x1x128xf32, #tpu.memory_space<vmem>>, %arg5: memref<128x128xbf16, #tpu.memory_space<vmem>>, %arg6: memref<128x128xbf16, #tpu.memory_space<vmem>>, %arg7: memref<1x128xf32, #tpu.memory_space<vmem>>, %arg8: memref<8x128xf32, #tpu.memory_space<vmem>>) attributes {dimension_semantics = [], scalar_prefetch = 0 : i64, scratch_operands = 0 : i64, tpu.core_type = #tpu.core_type<tc>} {
    %0 = tpu.iota {dimensions = array<i32: 1>} : vector<8x128xi32>
    %c12_i32 = arith.constant 12 : i32
    %1 = vector.broadcast %c12_i32 : i32 to vector<8x128xi32>
    %2 = arith.cmpi slt, %0, %1 : vector<8x128xi32>
    %c0 = arith.constant 0 : index
    %c0_0 = arith.constant 0 : index
    %3 = vector.load %arg2[%c0, %c0_0] : memref<8x128xf32, #tpu.memory_space<vmem>>, vector<8x128xf32>
    %c0_1 = arith.constant 0 : index
    %c0_2 = arith.constant 0 : index
    %4 = vector.load %arg5[%c0_1, %c0_2] : memref<128x128xbf16, #tpu.memory_space<vmem>>, vector<128x128xbf16>
    %c0_3 = arith.constant 0 : index
    %c0_4 = arith.constant 0 : index
    %5 = vector.load %arg6[%c0_3, %c0_4] : memref<128x128xbf16, #tpu.memory_space<vmem>>, vector<128x128xbf16>
    %c0_5 = arith.constant 0 : index
    %c0_6 = arith.constant 0 : index
    %6 = vector.load %arg7[%c0_5, %c0_6] : memref<1x128xf32, #tpu.memory_space<vmem>>, vector<1x128xf32>
    %c0_7 = arith.constant 0 : index
    %c0_8 = arith.constant 0 : index
    %7 = vector.load %arg1[%c0_7, %c0_8] : memref<8x128xf32, #tpu.memory_space<vmem>>, vector<8x128xf32>
    %c0_i32 = arith.constant 0 : i32
    %c8_i32 = arith.constant 8 : i32
    %8 = arith.muli %c0_i32, %c8_i32 : i32
    %c0_i32_9 = arith.constant 0 : i32
    %9 = arith.addi %8, %c0_i32_9 : i32
    %10 = arith.index_cast %9 : i32 to index
    %11 = memref.load %arg0[%10] : memref<80xf32, #tpu.memory_space<smem>>
    %c1_i32 = arith.constant 1 : i32
    %12 = arith.addi %8, %c1_i32 : i32
    %13 = arith.index_cast %12 : i32 to index
    %14 = memref.load %arg0[%13] : memref<80xf32, #tpu.memory_space<smem>>
    %c2_i32 = arith.constant 2 : i32
    %15 = arith.addi %8, %c2_i32 : i32
    %16 = arith.index_cast %15 : i32 to index
    %17 = memref.load %arg0[%16] : memref<80xf32, #tpu.memory_space<smem>>
    %c3_i32 = arith.constant 3 : i32
    %18 = arith.addi %8, %c3_i32 : i32
    %19 = arith.index_cast %18 : i32 to index
    %20 = memref.load %arg0[%19] : memref<80xf32, #tpu.memory_space<smem>>
    %c4_i32 = arith.constant 4 : i32
    %21 = arith.addi %8, %c4_i32 : i32
    %22 = arith.index_cast %21 : i32 to index
    %23 = memref.load %arg0[%22] : memref<80xf32, #tpu.memory_space<smem>>
    %24 = arith.truncf %7 : vector<8x128xf32> to vector<8x128xbf16>
    %cst = arith.constant dense<0.000000e+00> : vector<8x128xf32>
    %25 = tpu.matmul %24, %4, %cst {dimension_numbers = #tpu.dot_dimension_numbers<[1], [0], [0], [1], [0, 0, 1, 1], [], []>} : vector<8x128xbf16>, vector<128x128xbf16>, vector<8x128xf32> -> vector<8x128xf32>
    %26 = arith.index_cast %c0_i32 : i32 to index
    %c0_10 = arith.constant 0 : index
    %c0_11 = arith.constant 0 : index
    %27 = vector.load %arg4[%26, %c0_10, %c0_11] : memref<10x1x128xf32, #tpu.memory_space<vmem>>, vector<1x1x128xf32>
    %28 = vector.shape_cast %27 : vector<1x1x128xf32> to vector<1x128xf32>
    %29 = vector.broadcast %28 : vector<1x128xf32> to vector<8x128xf32>
    %30 = arith.addf %25, %29 : vector<8x128xf32>
    %31 = math.tanh %30 : vector<8x128xf32>
    %32 = arith.truncf %31 : vector<8x128xf32> to vector<8x128xbf16>
    %cst_12 = arith.constant dense<0.000000e+00> : vector<8x128xf32>
    %33 = tpu.matmul %32, %5, %cst_12 {dimension_numbers = #tpu.dot_dimension_numbers<[1], [0], [0], [1], [0, 0, 1, 1], [], []>} : vector<8x128xbf16>, vector<128x128xbf16>, vector<8x128xf32> -> vector<8x128xf32>
    %34 = vector.broadcast %6 : vector<1x128xf32> to vector<8x128xf32>
    %35 = arith.addf %33, %34 : vector<8x128xf32>
    %36 = vector.broadcast %11 : f32 to vector<8x128xf32>
    %37 = arith.mulf %36, %7 : vector<8x128xf32>
    %38 = vector.broadcast %14 : f32 to vector<8x128xf32>
    %39 = arith.mulf %38, %35 : vector<8x128xf32>
    %40 = arith.subf %37, %39 : vector<8x128xf32>
    %41 = vector.broadcast %17 : f32 to vector<8x128xf32>
    %42 = arith.mulf %41, %40 : vector<8x128xf32>
    %43 = vector.broadcast %20 : f32 to vector<8x128xf32>
    %44 = arith.mulf %43, %7 : vector<8x128xf32>
    %45 = arith.addf %42, %44 : vector<8x128xf32>
    %46 = arith.index_cast %c0_i32 : i32 to index
    %c0_13 = arith.constant 0 : index
    %c0_14 = arith.constant 0 : index
    %47 = vector.load %arg3[%46, %c0_13, %c0_14] : memref<10x8x128xf32, #tpu.memory_space<vmem>>, vector<1x8x128xf32>
    %48 = vector.shape_cast %47 : vector<1x8x128xf32> to vector<8x128xf32>
    %49 = vector.broadcast %23 : f32 to vector<8x128xf32>
    %50 = arith.mulf %49, %48 : vector<8x128xf32>
    %51 = arith.addf %45, %50 : vector<8x128xf32>
    %52 = arith.select %2, %3, %51 : vector<8x128xi1>, vector<8x128xf32>
    %c1_i32_15 = arith.constant 1 : i32
    %c8_i32_16 = arith.constant 8 : i32
    %53 = arith.muli %c1_i32_15, %c8_i32_16 : i32
    %c0_i32_17 = arith.constant 0 : i32
    %54 = arith.addi %53, %c0_i32_17 : i32
    %55 = arith.index_cast %54 : i32 to index
    %56 = memref.load %arg0[%55] : memref<80xf32, #tpu.memory_space<smem>>
    %c1_i32_18 = arith.constant 1 : i32
    %57 = arith.addi %53, %c1_i32_18 : i32
    %58 = arith.index_cast %57 : i32 to index
    %59 = memref.load %arg0[%58] : memref<80xf32, #tpu.memory_space<smem>>
    %c2_i32_19 = arith.constant 2 : i32
    %60 = arith.addi %53, %c2_i32_19 : i32
    %61 = arith.index_cast %60 : i32 to index
    %62 = memref.load %arg0[%61] : memref<80xf32, #tpu.memory_space<smem>>
    %c3_i32_20 = arith.constant 3 : i32
    %63 = arith.addi %53, %c3_i32_20 : i32
    %64 = arith.index_cast %63 : i32 to index
    %65 = memref.load %arg0[%64] : memref<80xf32, #tpu.memory_space<smem>>
    %c4_i32_21 = arith.constant 4 : i32
    %66 = arith.addi %53, %c4_i32_21 : i32
    %67 = arith.index_cast %66 : i32 to index
    %68 = memref.load %arg0[%67] : memref<80xf32, #tpu.memory_space<smem>>
    %69 = arith.truncf %52 : vector<8x128xf32> to vector<8x128xbf16>
    %cst_22 = arith.constant dense<0.000000e+00> : vector<8x128xf32>
    %70 = tpu.matmul %69, %4, %cst_22 {dimension_numbers = #tpu.dot_dimension_numbers<[1], [0], [0], [1], [0, 0, 1, 1], [], []>} : vector<8x128xbf16>, vector<128x128xbf16>, vector<8x128xf32> -> vector<8x128xf32>
    %71 = arith.index_cast %c1_i32_15 : i32 to index
    %c0_23 = arith.constant 0 : index
    %c0_24 = arith.constant 0 : index
    %72 = vector.load %arg4[%71, %c0_23, %c0_24] : memref<10x1x128xf32, #tpu.memory_space<vmem>>, vector<1x1x128xf32>
    %73 = vector.shape_cast %72 : vector<1x1x128xf32> to vector<1x128xf32>
    %74 = vector.broadcast %73 : vector<1x128xf32> to vector<8x128xf32>
    %75 = arith.addf %70, %74 : vector<8x128xf32>
    %76 = math.tanh %75 : vector<8x128xf32>
    %77 = arith.truncf %76 : vector<8x128xf32> to vector<8x128xbf16>
    %cst_25 = arith.constant dense<0.000000e+00> : vector<8x128xf32>
    %78 = tpu.matmul %77, %5, %cst_25 {dimension_numbers = #tpu.dot_dimension_numbers<[1], [0], [0], [1], [0, 0, 1, 1], [], []>} : vector<8x128xbf16>, vector<128x128xbf16>, vector<8x128xf32> -> vector<8x128xf32>
    %79 = vector.broadcast %6 : vector<1x128xf32> to vector<8x128xf32>
    %80 = arith.addf %78, %79 : vector<8x128xf32>
    %81 = vector.broadcast %56 : f32 to vector<8x128xf32>
    %82 = arith.mulf %81, %52 : vector<8x128xf32>
    %83 = vector.broadcast %59 : f32 to vector<8x128xf32>
    %84 = arith.mulf %83, %80 : vector<8x128xf32>
    %85 = arith.subf %82, %84 : vector<8x128xf32>
    %86 = vector.broadcast %62 : f32 to vector<8x128xf32>
    %87 = arith.mulf %86, %85 : vector<8x128xf32>
    %88 = vector.broadcast %65 : f32 to vector<8x128xf32>
    %89 = arith.mulf %88, %52 : vector<8x128xf32>
    %90 = arith.addf %87, %89 : vector<8x128xf32>
    %91 = arith.index_cast %c1_i32_15 : i32 to index
    %c0_26 = arith.constant 0 : index
    %c0_27 = arith.constant 0 : index
    %92 = vector.load %arg3[%91, %c0_26, %c0_27] : memref<10x8x128xf32, #tpu.memory_space<vmem>>, vector<1x8x128xf32>
    %93 = vector.shape_cast %92 : vector<1x8x128xf32> to vector<8x128xf32>
    %94 = vector.broadcast %68 : f32 to vector<8x128xf32>
    %95 = arith.mulf %94, %93 : vector<8x128xf32>
    %96 = arith.addf %90, %95 : vector<8x128xf32>
    %97 = arith.select %2, %3, %96 : vector<8x128xi1>, vector<8x128xf32>
    %c2_i32_28 = arith.constant 2 : i32
    %c8_i32_29 = arith.constant 8 : i32
    %98 = arith.muli %c2_i32_28, %c8_i32_29 : i32
    %c0_i32_30 = arith.constant 0 : i32
    %99 = arith.addi %98, %c0_i32_30 : i32
    %100 = arith.index_cast %99 : i32 to index
    %101 = memref.load %arg0[%100] : memref<80xf32, #tpu.memory_space<smem>>
    %c1_i32_31 = arith.constant 1 : i32
    %102 = arith.addi %98, %c1_i32_31 : i32
    %103 = arith.index_cast %102 : i32 to index
    %104 = memref.load %arg0[%103] : memref<80xf32, #tpu.memory_space<smem>>
    %c2_i32_32 = arith.constant 2 : i32
    %105 = arith.addi %98, %c2_i32_32 : i32
    %106 = arith.index_cast %105 : i32 to index
    %107 = memref.load %arg0[%106] : memref<80xf32, #tpu.memory_space<smem>>
    %c3_i32_33 = arith.constant 3 : i32
    %108 = arith.addi %98, %c3_i32_33 : i32
    %109 = arith.index_cast %108 : i32 to index
    %110 = memref.load %arg0[%109] : memref<80xf32, #tpu.memory_space<smem>>
    %c4_i32_34 = arith.constant 4 : i32
    %111 = arith.addi %98, %c4_i32_34 : i32
    %112 = arith.index_cast %111 : i32 to index
    %113 = memref.load %arg0[%112] : memref<80xf32, #tpu.memory_space<smem>>
    %114 = arith.truncf %97 : vector<8x128xf32> to vector<8x128xbf16>
    %cst_35 = arith.constant dense<0.000000e+00> : vector<8x128xf32>
    %115 = tpu.matmul %114, %4, %cst_35 {dimension_numbers = #tpu.dot_dimension_numbers<[1], [0], [0], [1], [0, 0, 1, 1], [], []>} : vector<8x128xbf16>, vector<128x128xbf16>, vector<8x128xf32> -> vector<8x128xf32>
    %116 = arith.index_cast %c2_i32_28 : i32 to index
    %c0_36 = arith.constant 0 : index
    %c0_37 = arith.constant 0 : index
    %117 = vector.load %arg4[%116, %c0_36, %c0_37] : memref<10x1x128xf32, #tpu.memory_space<vmem>>, vector<1x1x128xf32>
    %118 = vector.shape_cast %117 : vector<1x1x128xf32> to vector<1x128xf32>
    %119 = vector.broadcast %118 : vector<1x128xf32> to vector<8x128xf32>
    %120 = arith.addf %115, %119 : vector<8x128xf32>
    %121 = math.tanh %120 : vector<8x128xf32>
    %122 = arith.truncf %121 : vector<8x128xf32> to vector<8x128xbf16>
    %cst_38 = arith.constant dense<0.000000e+00> : vector<8x128xf32>
    %123 = tpu.matmul %122, %5, %cst_38 {dimension_numbers = #tpu.dot_dimension_numbers<[1], [0], [0], [1], [0, 0, 1, 1], [], []>} : vector<8x128xbf16>, vector<128x128xbf16>, vector<8x128xf32> -> vector<8x128xf32>
    %124 = vector.broadcast %6 : vector<1x128xf32> to vector<8x128xf32>
    %125 = arith.addf %123, %124 : vector<8x128xf32>
    %126 = vector.broadcast %101 : f32 to vector<8x128xf32>
    %127 = arith.mulf %126, %97 : vector<8x128xf32>
    %128 = vector.broadcast %104 : f32 to vector<8x128xf32>
    %129 = arith.mulf %128, %125 : vector<8x128xf32>
    %130 = arith.subf %127, %129 : vector<8x128xf32>
    %131 = vector.broadcast %107 : f32 to vector<8x128xf32>
    %132 = arith.mulf %131, %130 : vector<8x128xf32>
    %133 = vector.broadcast %110 : f32 to vector<8x128xf32>
    %134 = arith.mulf %133, %97 : vector<8x128xf32>
    %135 = arith.addf %132, %134 : vector<8x128xf32>
    %136 = arith.index_cast %c2_i32_28 : i32 to index
    %c0_39 = arith.constant 0 : index
    %c0_40 = arith.constant 0 : index
    %137 = vector.load %arg3[%136, %c0_39, %c0_40] : memref<10x8x128xf32, #tpu.memory_space<vmem>>, vector<1x8x128xf32>
    %138 = vector.shape_cast %137 : vector<1x8x128xf32> to vector<8x128xf32>
    %139 = vector.broadcast %113 : f32 to vector<8x128xf32>
    %140 = arith.mulf %139, %138 : vector<8x128xf32>
    %141 = arith.addf %135, %140 : vector<8x128xf32>
    %142 = arith.select %2, %3, %141 : vector<8x128xi1>, vector<8x128xf32>
    %c3_i32_41 = arith.constant 3 : i32
    %c8_i32_42 = arith.constant 8 : i32
    %143 = arith.muli %c3_i32_41, %c8_i32_42 : i32
    %c0_i32_43 = arith.constant 0 : i32
    %144 = arith.addi %143, %c0_i32_43 : i32
    %145 = arith.index_cast %144 : i32 to index
    %146 = memref.load %arg0[%145] : memref<80xf32, #tpu.memory_space<smem>>
    %c1_i32_44 = arith.constant 1 : i32
    %147 = arith.addi %143, %c1_i32_44 : i32
    %148 = arith.index_cast %147 : i32 to index
    %149 = memref.load %arg0[%148] : memref<80xf32, #tpu.memory_space<smem>>
    %c2_i32_45 = arith.constant 2 : i32
    %150 = arith.addi %143, %c2_i32_45 : i32
    %151 = arith.index_cast %150 : i32 to index
    %152 = memref.load %arg0[%151] : memref<80xf32, #tpu.memory_space<smem>>
    %c3_i32_46 = arith.constant 3 : i32
    %153 = arith.addi %143, %c3_i32_46 : i32
    %154 = arith.index_cast %153 : i32 to index
    %155 = memref.load %arg0[%154] : memref<80xf32, #tpu.memory_space<smem>>
    %c4_i32_47 = arith.constant 4 : i32
    %156 = arith.addi %143, %c4_i32_47 : i32
    %157 = arith.index_cast %156 : i32 to index
    %158 = memref.load %arg0[%157] : memref<80xf32, #tpu.memory_space<smem>>
    %159 = arith.truncf %142 : vector<8x128xf32> to vector<8x128xbf16>
    %cst_48 = arith.constant dense<0.000000e+00> : vector<8x128xf32>
    %160 = tpu.matmul %159, %4, %cst_48 {dimension_numbers = #tpu.dot_dimension_numbers<[1], [0], [0], [1], [0, 0, 1, 1], [], []>} : vector<8x128xbf16>, vector<128x128xbf16>, vector<8x128xf32> -> vector<8x128xf32>
    %161 = arith.index_cast %c3_i32_41 : i32 to index
    %c0_49 = arith.constant 0 : index
    %c0_50 = arith.constant 0 : index
    %162 = vector.load %arg4[%161, %c0_49, %c0_50] : memref<10x1x128xf32, #tpu.memory_space<vmem>>, vector<1x1x128xf32>
    %163 = vector.shape_cast %162 : vector<1x1x128xf32> to vector<1x128xf32>
    %164 = vector.broadcast %163 : vector<1x128xf32> to vector<8x128xf32>
    %165 = arith.addf %160, %164 : vector<8x128xf32>
    %166 = math.tanh %165 : vector<8x128xf32>
    %167 = arith.truncf %166 : vector<8x128xf32> to vector<8x128xbf16>
    %cst_51 = arith.constant dense<0.000000e+00> : vector<8x128xf32>
    %168 = tpu.matmul %167, %5, %cst_51 {dimension_numbers = #tpu.dot_dimension_numbers<[1], [0], [0], [1], [0, 0, 1, 1], [], []>} : vector<8x128xbf16>, vector<128x128xbf16>, vector<8x128xf32> -> vector<8x128xf32>
    %169 = vector.broadcast %6 : vector<1x128xf32> to vector<8x128xf32>
    %170 = arith.addf %168, %169 : vector<8x128xf32>
    %171 = vector.broadcast %146 : f32 to vector<8x128xf32>
    %172 = arith.mulf %171, %142 : vector<8x128xf32>
    %173 = vector.broadcast %149 : f32 to vector<8x128xf32>
    %174 = arith.mulf %173, %170 : vector<8x128xf32>
    %175 = arith.subf %172, %174 : vector<8x128xf32>
    %176 = vector.broadcast %152 : f32 to vector<8x128xf32>
    %177 = arith.mulf %176, %175 : vector<8x128xf32>
    %178 = vector.broadcast %155 : f32 to vector<8x128xf32>
    %179 = arith.mulf %178, %142 : vector<8x128xf32>
    %180 = arith.addf %177, %179 : vector<8x128xf32>
    %181 = arith.index_cast %c3_i32_41 : i32 to index
    %c0_52 = arith.constant 0 : index
    %c0_53 = arith.constant 0 : index
    %182 = vector.load %arg3[%181, %c0_52, %c0_53] : memref<10x8x128xf32, #tpu.memory_space<vmem>>, vector<1x8x128xf32>
    %183 = vector.shape_cast %182 : vector<1x8x128xf32> to vector<8x128xf32>
    %184 = vector.broadcast %158 : f32 to vector<8x128xf32>
    %185 = arith.mulf %184, %183 : vector<8x128xf32>
    %186 = arith.addf %180, %185 : vector<8x128xf32>
    %187 = arith.select %2, %3, %186 : vector<8x128xi1>, vector<8x128xf32>
    %c4_i32_54 = arith.constant 4 : i32
    %c8_i32_55 = arith.constant 8 : i32
    %188 = arith.muli %c4_i32_54, %c8_i32_55 : i32
    %c0_i32_56 = arith.constant 0 : i32
    %189 = arith.addi %188, %c0_i32_56 : i32
    %190 = arith.index_cast %189 : i32 to index
    %191 = memref.load %arg0[%190] : memref<80xf32, #tpu.memory_space<smem>>
    %c1_i32_57 = arith.constant 1 : i32
    %192 = arith.addi %188, %c1_i32_57 : i32
    %193 = arith.index_cast %192 : i32 to index
    %194 = memref.load %arg0[%193] : memref<80xf32, #tpu.memory_space<smem>>
    %c2_i32_58 = arith.constant 2 : i32
    %195 = arith.addi %188, %c2_i32_58 : i32
    %196 = arith.index_cast %195 : i32 to index
    %197 = memref.load %arg0[%196] : memref<80xf32, #tpu.memory_space<smem>>
    %c3_i32_59 = arith.constant 3 : i32
    %198 = arith.addi %188, %c3_i32_59 : i32
    %199 = arith.index_cast %198 : i32 to index
    %200 = memref.load %arg0[%199] : memref<80xf32, #tpu.memory_space<smem>>
    %c4_i32_60 = arith.constant 4 : i32
    %201 = arith.addi %188, %c4_i32_60 : i32
    %202 = arith.index_cast %201 : i32 to index
    %203 = memref.load %arg0[%202] : memref<80xf32, #tpu.memory_space<smem>>
    %204 = arith.truncf %187 : vector<8x128xf32> to vector<8x128xbf16>
    %cst_61 = arith.constant dense<0.000000e+00> : vector<8x128xf32>
    %205 = tpu.matmul %204, %4, %cst_61 {dimension_numbers = #tpu.dot_dimension_numbers<[1], [0], [0], [1], [0, 0, 1, 1], [], []>} : vector<8x128xbf16>, vector<128x128xbf16>, vector<8x128xf32> -> vector<8x128xf32>
    %206 = arith.index_cast %c4_i32_54 : i32 to index
    %c0_62 = arith.constant 0 : index
    %c0_63 = arith.constant 0 : index
    %207 = vector.load %arg4[%206, %c0_62, %c0_63] : memref<10x1x128xf32, #tpu.memory_space<vmem>>, vector<1x1x128xf32>
    %208 = vector.shape_cast %207 : vector<1x1x128xf32> to vector<1x128xf32>
    %209 = vector.broadcast %208 : vector<1x128xf32> to vector<8x128xf32>
    %210 = arith.addf %205, %209 : vector<8x128xf32>
    %211 = math.tanh %210 : vector<8x128xf32>
    %212 = arith.truncf %211 : vector<8x128xf32> to vector<8x128xbf16>
    %cst_64 = arith.constant dense<0.000000e+00> : vector<8x128xf32>
    %213 = tpu.matmul %212, %5, %cst_64 {dimension_numbers = #tpu.dot_dimension_numbers<[1], [0], [0], [1], [0, 0, 1, 1], [], []>} : vector<8x128xbf16>, vector<128x128xbf16>, vector<8x128xf32> -> vector<8x128xf32>
    %214 = vector.broadcast %6 : vector<1x128xf32> to vector<8x128xf32>
    %215 = arith.addf %213, %214 : vector<8x128xf32>
    %216 = vector.broadcast %191 : f32 to vector<8x128xf32>
    %217 = arith.mulf %216, %187 : vector<8x128xf32>
    %218 = vector.broadcast %194 : f32 to vector<8x128xf32>
    %219 = arith.mulf %218, %215 : vector<8x128xf32>
    %220 = arith.subf %217, %219 : vector<8x128xf32>
    %221 = vector.broadcast %197 : f32 to vector<8x128xf32>
    %222 = arith.mulf %221, %220 : vector<8x128xf32>
    %223 = vector.broadcast %200 : f32 to vector<8x128xf32>
    %224 = arith.mulf %223, %187 : vector<8x128xf32>
    %225 = arith.addf %222, %224 : vector<8x128xf32>
    %226 = arith.index_cast %c4_i32_54 : i32 to index
    %c0_65 = arith.constant 0 : index
    %c0_66 = arith.constant 0 : index
    %227 = vector.load %arg3[%226, %c0_65, %c0_66] : memref<10x8x128xf32, #tpu.memory_space<vmem>>, vector<1x8x128xf32>
    %228 = vector.shape_cast %227 : vector<1x8x128xf32> to vector<8x128xf32>
    %229 = vector.broadcast %203 : f32 to vector<8x128xf32>
    %230 = arith.mulf %229, %228 : vector<8x128xf32>
    %231 = arith.addf %225, %230 : vector<8x128xf32>
    %232 = arith.select %2, %3, %231 : vector<8x128xi1>, vector<8x128xf32>
    %c5_i32 = arith.constant 5 : i32
    %c8_i32_67 = arith.constant 8 : i32
    %233 = arith.muli %c5_i32, %c8_i32_67 : i32
    %c0_i32_68 = arith.constant 0 : i32
    %234 = arith.addi %233, %c0_i32_68 : i32
    %235 = arith.index_cast %234 : i32 to index
    %236 = memref.load %arg0[%235] : memref<80xf32, #tpu.memory_space<smem>>
    %c1_i32_69 = arith.constant 1 : i32
    %237 = arith.addi %233, %c1_i32_69 : i32
    %238 = arith.index_cast %237 : i32 to index
    %239 = memref.load %arg0[%238] : memref<80xf32, #tpu.memory_space<smem>>
    %c2_i32_70 = arith.constant 2 : i32
    %240 = arith.addi %233, %c2_i32_70 : i32
    %241 = arith.index_cast %240 : i32 to index
    %242 = memref.load %arg0[%241] : memref<80xf32, #tpu.memory_space<smem>>
    %c3_i32_71 = arith.constant 3 : i32
    %243 = arith.addi %233, %c3_i32_71 : i32
    %244 = arith.index_cast %243 : i32 to index
    %245 = memref.load %arg0[%244] : memref<80xf32, #tpu.memory_space<smem>>
    %c4_i32_72 = arith.constant 4 : i32
    %246 = arith.addi %233, %c4_i32_72 : i32
    %247 = arith.index_cast %246 : i32 to index
    %248 = memref.load %arg0[%247] : memref<80xf32, #tpu.memory_space<smem>>
    %249 = arith.truncf %232 : vector<8x128xf32> to vector<8x128xbf16>
    %cst_73 = arith.constant dense<0.000000e+00> : vector<8x128xf32>
    %250 = tpu.matmul %249, %4, %cst_73 {dimension_numbers = #tpu.dot_dimension_numbers<[1], [0], [0], [1], [0, 0, 1, 1], [], []>} : vector<8x128xbf16>, vector<128x128xbf16>, vector<8x128xf32> -> vector<8x128xf32>
    %251 = arith.index_cast %c5_i32 : i32 to index
    %c0_74 = arith.constant 0 : index
    %c0_75 = arith.constant 0 : index
    %252 = vector.load %arg4[%251, %c0_74, %c0_75] : memref<10x1x128xf32, #tpu.memory_space<vmem>>, vector<1x1x128xf32>
    %253 = vector.shape_cast %252 : vector<1x1x128xf32> to vector<1x128xf32>
    %254 = vector.broadcast %253 : vector<1x128xf32> to vector<8x128xf32>
    %255 = arith.addf %250, %254 : vector<8x128xf32>
    %256 = math.tanh %255 : vector<8x128xf32>
    %257 = arith.truncf %256 : vector<8x128xf32> to vector<8x128xbf16>
    %cst_76 = arith.constant dense<0.000000e+00> : vector<8x128xf32>
    %258 = tpu.matmul %257, %5, %cst_76 {dimension_numbers = #tpu.dot_dimension_numbers<[1], [0], [0], [1], [0, 0, 1, 1], [], []>} : vector<8x128xbf16>, vector<128x128xbf16>, vector<8x128xf32> -> vector<8x128xf32>
    %259 = vector.broadcast %6 : vector<1x128xf32> to vector<8x128xf32>
    %260 = arith.addf %258, %259 : vector<8x128xf32>
    %261 = vector.broadcast %236 : f32 to vector<8x128xf32>
    %262 = arith.mulf %261, %232 : vector<8x128xf32>
    %263 = vector.broadcast %239 : f32 to vector<8x128xf32>
    %264 = arith.mulf %263, %260 : vector<8x128xf32>
    %265 = arith.subf %262, %264 : vector<8x128xf32>
    %266 = vector.broadcast %242 : f32 to vector<8x128xf32>
    %267 = arith.mulf %266, %265 : vector<8x128xf32>
    %268 = vector.broadcast %245 : f32 to vector<8x128xf32>
    %269 = arith.mulf %268, %232 : vector<8x128xf32>
    %270 = arith.addf %267, %269 : vector<8x128xf32>
    %271 = arith.index_cast %c5_i32 : i32 to index
    %c0_77 = arith.constant 0 : index
    %c0_78 = arith.constant 0 : index
    %272 = vector.load %arg3[%271, %c0_77, %c0_78] : memref<10x8x128xf32, #tpu.memory_space<vmem>>, vector<1x8x128xf32>
    %273 = vector.shape_cast %272 : vector<1x8x128xf32> to vector<8x128xf32>
    %274 = vector.broadcast %248 : f32 to vector<8x128xf32>
    %275 = arith.mulf %274, %273 : vector<8x128xf32>
    %276 = arith.addf %270, %275 : vector<8x128xf32>
    %277 = arith.select %2, %3, %276 : vector<8x128xi1>, vector<8x128xf32>
    %c6_i32 = arith.constant 6 : i32
    %c8_i32_79 = arith.constant 8 : i32
    %278 = arith.muli %c6_i32, %c8_i32_79 : i32
    %c0_i32_80 = arith.constant 0 : i32
    %279 = arith.addi %278, %c0_i32_80 : i32
    %280 = arith.index_cast %279 : i32 to index
    %281 = memref.load %arg0[%280] : memref<80xf32, #tpu.memory_space<smem>>
    %c1_i32_81 = arith.constant 1 : i32
    %282 = arith.addi %278, %c1_i32_81 : i32
    %283 = arith.index_cast %282 : i32 to index
    %284 = memref.load %arg0[%283] : memref<80xf32, #tpu.memory_space<smem>>
    %c2_i32_82 = arith.constant 2 : i32
    %285 = arith.addi %278, %c2_i32_82 : i32
    %286 = arith.index_cast %285 : i32 to index
    %287 = memref.load %arg0[%286] : memref<80xf32, #tpu.memory_space<smem>>
    %c3_i32_83 = arith.constant 3 : i32
    %288 = arith.addi %278, %c3_i32_83 : i32
    %289 = arith.index_cast %288 : i32 to index
    %290 = memref.load %arg0[%289] : memref<80xf32, #tpu.memory_space<smem>>
    %c4_i32_84 = arith.constant 4 : i32
    %291 = arith.addi %278, %c4_i32_84 : i32
    %292 = arith.index_cast %291 : i32 to index
    %293 = memref.load %arg0[%292] : memref<80xf32, #tpu.memory_space<smem>>
    %294 = arith.truncf %277 : vector<8x128xf32> to vector<8x128xbf16>
    %cst_85 = arith.constant dense<0.000000e+00> : vector<8x128xf32>
    %295 = tpu.matmul %294, %4, %cst_85 {dimension_numbers = #tpu.dot_dimension_numbers<[1], [0], [0], [1], [0, 0, 1, 1], [], []>} : vector<8x128xbf16>, vector<128x128xbf16>, vector<8x128xf32> -> vector<8x128xf32>
    %296 = arith.index_cast %c6_i32 : i32 to index
    %c0_86 = arith.constant 0 : index
    %c0_87 = arith.constant 0 : index
    %297 = vector.load %arg4[%296, %c0_86, %c0_87] : memref<10x1x128xf32, #tpu.memory_space<vmem>>, vector<1x1x128xf32>
    %298 = vector.shape_cast %297 : vector<1x1x128xf32> to vector<1x128xf32>
    %299 = vector.broadcast %298 : vector<1x128xf32> to vector<8x128xf32>
    %300 = arith.addf %295, %299 : vector<8x128xf32>
    %301 = math.tanh %300 : vector<8x128xf32>
    %302 = arith.truncf %301 : vector<8x128xf32> to vector<8x128xbf16>
    %cst_88 = arith.constant dense<0.000000e+00> : vector<8x128xf32>
    %303 = tpu.matmul %302, %5, %cst_88 {dimension_numbers = #tpu.dot_dimension_numbers<[1], [0], [0], [1], [0, 0, 1, 1], [], []>} : vector<8x128xbf16>, vector<128x128xbf16>, vector<8x128xf32> -> vector<8x128xf32>
    %304 = vector.broadcast %6 : vector<1x128xf32> to vector<8x128xf32>
    %305 = arith.addf %303, %304 : vector<8x128xf32>
    %306 = vector.broadcast %281 : f32 to vector<8x128xf32>
    %307 = arith.mulf %306, %277 : vector<8x128xf32>
    %308 = vector.broadcast %284 : f32 to vector<8x128xf32>
    %309 = arith.mulf %308, %305 : vector<8x128xf32>
    %310 = arith.subf %307, %309 : vector<8x128xf32>
    %311 = vector.broadcast %287 : f32 to vector<8x128xf32>
    %312 = arith.mulf %311, %310 : vector<8x128xf32>
    %313 = vector.broadcast %290 : f32 to vector<8x128xf32>
    %314 = arith.mulf %313, %277 : vector<8x128xf32>
    %315 = arith.addf %312, %314 : vector<8x128xf32>
    %316 = arith.index_cast %c6_i32 : i32 to index
    %c0_89 = arith.constant 0 : index
    %c0_90 = arith.constant 0 : index
    %317 = vector.load %arg3[%316, %c0_89, %c0_90] : memref<10x8x128xf32, #tpu.memory_space<vmem>>, vector<1x8x128xf32>
    %318 = vector.shape_cast %317 : vector<1x8x128xf32> to vector<8x128xf32>
    %319 = vector.broadcast %293 : f32 to vector<8x128xf32>
    %320 = arith.mulf %319, %318 : vector<8x128xf32>
    %321 = arith.addf %315, %320 : vector<8x128xf32>
    %322 = arith.select %2, %3, %321 : vector<8x128xi1>, vector<8x128xf32>
    %c7_i32 = arith.constant 7 : i32
    %c8_i32_91 = arith.constant 8 : i32
    %323 = arith.muli %c7_i32, %c8_i32_91 : i32
    %c0_i32_92 = arith.constant 0 : i32
    %324 = arith.addi %323, %c0_i32_92 : i32
    %325 = arith.index_cast %324 : i32 to index
    %326 = memref.load %arg0[%325] : memref<80xf32, #tpu.memory_space<smem>>
    %c1_i32_93 = arith.constant 1 : i32
    %327 = arith.addi %323, %c1_i32_93 : i32
    %328 = arith.index_cast %327 : i32 to index
    %329 = memref.load %arg0[%328] : memref<80xf32, #tpu.memory_space<smem>>
    %c2_i32_94 = arith.constant 2 : i32
    %330 = arith.addi %323, %c2_i32_94 : i32
    %331 = arith.index_cast %330 : i32 to index
    %332 = memref.load %arg0[%331] : memref<80xf32, #tpu.memory_space<smem>>
    %c3_i32_95 = arith.constant 3 : i32
    %333 = arith.addi %323, %c3_i32_95 : i32
    %334 = arith.index_cast %333 : i32 to index
    %335 = memref.load %arg0[%334] : memref<80xf32, #tpu.memory_space<smem>>
    %c4_i32_96 = arith.constant 4 : i32
    %336 = arith.addi %323, %c4_i32_96 : i32
    %337 = arith.index_cast %336 : i32 to index
    %338 = memref.load %arg0[%337] : memref<80xf32, #tpu.memory_space<smem>>
    %339 = arith.truncf %322 : vector<8x128xf32> to vector<8x128xbf16>
    %cst_97 = arith.constant dense<0.000000e+00> : vector<8x128xf32>
    %340 = tpu.matmul %339, %4, %cst_97 {dimension_numbers = #tpu.dot_dimension_numbers<[1], [0], [0], [1], [0, 0, 1, 1], [], []>} : vector<8x128xbf16>, vector<128x128xbf16>, vector<8x128xf32> -> vector<8x128xf32>
    %341 = arith.index_cast %c7_i32 : i32 to index
    %c0_98 = arith.constant 0 : index
    %c0_99 = arith.constant 0 : index
    %342 = vector.load %arg4[%341, %c0_98, %c0_99] : memref<10x1x128xf32, #tpu.memory_space<vmem>>, vector<1x1x128xf32>
    %343 = vector.shape_cast %342 : vector<1x1x128xf32> to vector<1x128xf32>
    %344 = vector.broadcast %343 : vector<1x128xf32> to vector<8x128xf32>
    %345 = arith.addf %340, %344 : vector<8x128xf32>
    %346 = math.tanh %345 : vector<8x128xf32>
    %347 = arith.truncf %346 : vector<8x128xf32> to vector<8x128xbf16>
    %cst_100 = arith.constant dense<0.000000e+00> : vector<8x128xf32>
    %348 = tpu.matmul %347, %5, %cst_100 {dimension_numbers = #tpu.dot_dimension_numbers<[1], [0], [0], [1], [0, 0, 1, 1], [], []>} : vector<8x128xbf16>, vector<128x128xbf16>, vector<8x128xf32> -> vector<8x128xf32>
    %349 = vector.broadcast %6 : vector<1x128xf32> to vector<8x128xf32>
    %350 = arith.addf %348, %349 : vector<8x128xf32>
    %351 = vector.broadcast %326 : f32 to vector<8x128xf32>
    %352 = arith.mulf %351, %322 : vector<8x128xf32>
    %353 = vector.broadcast %329 : f32 to vector<8x128xf32>
    %354 = arith.mulf %353, %350 : vector<8x128xf32>
    %355 = arith.subf %352, %354 : vector<8x128xf32>
    %356 = vector.broadcast %332 : f32 to vector<8x128xf32>
    %357 = arith.mulf %356, %355 : vector<8x128xf32>
    %358 = vector.broadcast %335 : f32 to vector<8x128xf32>
    %359 = arith.mulf %358, %322 : vector<8x128xf32>
    %360 = arith.addf %357, %359 : vector<8x128xf32>
    %361 = arith.index_cast %c7_i32 : i32 to index
    %c0_101 = arith.constant 0 : index
    %c0_102 = arith.constant 0 : index
    %362 = vector.load %arg3[%361, %c0_101, %c0_102] : memref<10x8x128xf32, #tpu.memory_space<vmem>>, vector<1x8x128xf32>
    %363 = vector.shape_cast %362 : vector<1x8x128xf32> to vector<8x128xf32>
    %364 = vector.broadcast %338 : f32 to vector<8x128xf32>
    %365 = arith.mulf %364, %363 : vector<8x128xf32>
    %366 = arith.addf %360, %365 : vector<8x128xf32>
    %367 = arith.select %2, %3, %366 : vector<8x128xi1>, vector<8x128xf32>
    %c8_i32_103 = arith.constant 8 : i32
    %c8_i32_104 = arith.constant 8 : i32
    %368 = arith.muli %c8_i32_103, %c8_i32_104 : i32
    %c0_i32_105 = arith.constant 0 : i32
    %369 = arith.addi %368, %c0_i32_105 : i32
    %370 = arith.index_cast %369 : i32 to index
    %371 = memref.load %arg0[%370] : memref<80xf32, #tpu.memory_space<smem>>
    %c1_i32_106 = arith.constant 1 : i32
    %372 = arith.addi %368, %c1_i32_106 : i32
    %373 = arith.index_cast %372 : i32 to index
    %374 = memref.load %arg0[%373] : memref<80xf32, #tpu.memory_space<smem>>
    %c2_i32_107 = arith.constant 2 : i32
    %375 = arith.addi %368, %c2_i32_107 : i32
    %376 = arith.index_cast %375 : i32 to index
    %377 = memref.load %arg0[%376] : memref<80xf32, #tpu.memory_space<smem>>
    %c3_i32_108 = arith.constant 3 : i32
    %378 = arith.addi %368, %c3_i32_108 : i32
    %379 = arith.index_cast %378 : i32 to index
    %380 = memref.load %arg0[%379] : memref<80xf32, #tpu.memory_space<smem>>
    %c4_i32_109 = arith.constant 4 : i32
    %381 = arith.addi %368, %c4_i32_109 : i32
    %382 = arith.index_cast %381 : i32 to index
    %383 = memref.load %arg0[%382] : memref<80xf32, #tpu.memory_space<smem>>
    %384 = arith.truncf %367 : vector<8x128xf32> to vector<8x128xbf16>
    %cst_110 = arith.constant dense<0.000000e+00> : vector<8x128xf32>
    %385 = tpu.matmul %384, %4, %cst_110 {dimension_numbers = #tpu.dot_dimension_numbers<[1], [0], [0], [1], [0, 0, 1, 1], [], []>} : vector<8x128xbf16>, vector<128x128xbf16>, vector<8x128xf32> -> vector<8x128xf32>
    %386 = arith.index_cast %c8_i32_103 : i32 to index
    %c0_111 = arith.constant 0 : index
    %c0_112 = arith.constant 0 : index
    %387 = vector.load %arg4[%386, %c0_111, %c0_112] : memref<10x1x128xf32, #tpu.memory_space<vmem>>, vector<1x1x128xf32>
    %388 = vector.shape_cast %387 : vector<1x1x128xf32> to vector<1x128xf32>
    %389 = vector.broadcast %388 : vector<1x128xf32> to vector<8x128xf32>
    %390 = arith.addf %385, %389 : vector<8x128xf32>
    %391 = math.tanh %390 : vector<8x128xf32>
    %392 = arith.truncf %391 : vector<8x128xf32> to vector<8x128xbf16>
    %cst_113 = arith.constant dense<0.000000e+00> : vector<8x128xf32>
    %393 = tpu.matmul %392, %5, %cst_113 {dimension_numbers = #tpu.dot_dimension_numbers<[1], [0], [0], [1], [0, 0, 1, 1], [], []>} : vector<8x128xbf16>, vector<128x128xbf16>, vector<8x128xf32> -> vector<8x128xf32>
    %394 = vector.broadcast %6 : vector<1x128xf32> to vector<8x128xf32>
    %395 = arith.addf %393, %394 : vector<8x128xf32>
    %396 = vector.broadcast %371 : f32 to vector<8x128xf32>
    %397 = arith.mulf %396, %367 : vector<8x128xf32>
    %398 = vector.broadcast %374 : f32 to vector<8x128xf32>
    %399 = arith.mulf %398, %395 : vector<8x128xf32>
    %400 = arith.subf %397, %399 : vector<8x128xf32>
    %401 = vector.broadcast %377 : f32 to vector<8x128xf32>
    %402 = arith.mulf %401, %400 : vector<8x128xf32>
    %403 = vector.broadcast %380 : f32 to vector<8x128xf32>
    %404 = arith.mulf %403, %367 : vector<8x128xf32>
    %405 = arith.addf %402, %404 : vector<8x128xf32>
    %406 = arith.index_cast %c8_i32_103 : i32 to index
    %c0_114 = arith.constant 0 : index
    %c0_115 = arith.constant 0 : index
    %407 = vector.load %arg3[%406, %c0_114, %c0_115] : memref<10x8x128xf32, #tpu.memory_space<vmem>>, vector<1x8x128xf32>
    %408 = vector.shape_cast %407 : vector<1x8x128xf32> to vector<8x128xf32>
    %409 = vector.broadcast %383 : f32 to vector<8x128xf32>
    %410 = arith.mulf %409, %408 : vector<8x128xf32>
    %411 = arith.addf %405, %410 : vector<8x128xf32>
    %412 = arith.select %2, %3, %411 : vector<8x128xi1>, vector<8x128xf32>
    %c9_i32 = arith.constant 9 : i32
    %c8_i32_116 = arith.constant 8 : i32
    %413 = arith.muli %c9_i32, %c8_i32_116 : i32
    %c0_i32_117 = arith.constant 0 : i32
    %414 = arith.addi %413, %c0_i32_117 : i32
    %415 = arith.index_cast %414 : i32 to index
    %416 = memref.load %arg0[%415] : memref<80xf32, #tpu.memory_space<smem>>
    %c1_i32_118 = arith.constant 1 : i32
    %417 = arith.addi %413, %c1_i32_118 : i32
    %418 = arith.index_cast %417 : i32 to index
    %419 = memref.load %arg0[%418] : memref<80xf32, #tpu.memory_space<smem>>
    %c2_i32_119 = arith.constant 2 : i32
    %420 = arith.addi %413, %c2_i32_119 : i32
    %421 = arith.index_cast %420 : i32 to index
    %422 = memref.load %arg0[%421] : memref<80xf32, #tpu.memory_space<smem>>
    %c3_i32_120 = arith.constant 3 : i32
    %423 = arith.addi %413, %c3_i32_120 : i32
    %424 = arith.index_cast %423 : i32 to index
    %425 = memref.load %arg0[%424] : memref<80xf32, #tpu.memory_space<smem>>
    %c4_i32_121 = arith.constant 4 : i32
    %426 = arith.addi %413, %c4_i32_121 : i32
    %427 = arith.index_cast %426 : i32 to index
    %428 = memref.load %arg0[%427] : memref<80xf32, #tpu.memory_space<smem>>
    %429 = arith.truncf %412 : vector<8x128xf32> to vector<8x128xbf16>
    %cst_122 = arith.constant dense<0.000000e+00> : vector<8x128xf32>
    %430 = tpu.matmul %429, %4, %cst_122 {dimension_numbers = #tpu.dot_dimension_numbers<[1], [0], [0], [1], [0, 0, 1, 1], [], []>} : vector<8x128xbf16>, vector<128x128xbf16>, vector<8x128xf32> -> vector<8x128xf32>
    %431 = arith.index_cast %c9_i32 : i32 to index
    %c0_123 = arith.constant 0 : index
    %c0_124 = arith.constant 0 : index
    %432 = vector.load %arg4[%431, %c0_123, %c0_124] : memref<10x1x128xf32, #tpu.memory_space<vmem>>, vector<1x1x128xf32>
    %433 = vector.shape_cast %432 : vector<1x1x128xf32> to vector<1x128xf32>
    %434 = vector.broadcast %433 : vector<1x128xf32> to vector<8x128xf32>
    %435 = arith.addf %430, %434 : vector<8x128xf32>
    %436 = math.tanh %435 : vector<8x128xf32>
    %437 = arith.truncf %436 : vector<8x128xf32> to vector<8x128xbf16>
    %cst_125 = arith.constant dense<0.000000e+00> : vector<8x128xf32>
    %438 = tpu.matmul %437, %5, %cst_125 {dimension_numbers = #tpu.dot_dimension_numbers<[1], [0], [0], [1], [0, 0, 1, 1], [], []>} : vector<8x128xbf16>, vector<128x128xbf16>, vector<8x128xf32> -> vector<8x128xf32>
    %439 = vector.broadcast %6 : vector<1x128xf32> to vector<8x128xf32>
    %440 = arith.addf %438, %439 : vector<8x128xf32>
    %441 = vector.broadcast %416 : f32 to vector<8x128xf32>
    %442 = arith.mulf %441, %412 : vector<8x128xf32>
    %443 = vector.broadcast %419 : f32 to vector<8x128xf32>
    %444 = arith.mulf %443, %440 : vector<8x128xf32>
    %445 = arith.subf %442, %444 : vector<8x128xf32>
    %446 = vector.broadcast %422 : f32 to vector<8x128xf32>
    %447 = arith.mulf %446, %445 : vector<8x128xf32>
    %448 = vector.broadcast %425 : f32 to vector<8x128xf32>
    %449 = arith.mulf %448, %412 : vector<8x128xf32>
    %450 = arith.addf %447, %449 : vector<8x128xf32>
    %451 = arith.index_cast %c9_i32 : i32 to index
    %c0_126 = arith.constant 0 : index
    %c0_127 = arith.constant 0 : index
    %452 = vector.load %arg3[%451, %c0_126, %c0_127] : memref<10x8x128xf32, #tpu.memory_space<vmem>>, vector<1x8x128xf32>
    %453 = vector.shape_cast %452 : vector<1x8x128xf32> to vector<8x128xf32>
    %454 = vector.broadcast %428 : f32 to vector<8x128xf32>
    %455 = arith.mulf %454, %453 : vector<8x128xf32>
    %456 = arith.addf %450, %455 : vector<8x128xf32>
    %457 = arith.select %2, %3, %456 : vector<8x128xi1>, vector<8x128xf32>
    %c10_i32 = arith.constant 10 : i32
    %c0_128 = arith.constant 0 : index
    %c0_129 = arith.constant 0 : index
    %458 = vector.load %arg8[%c0_128, %c0_129] : memref<8x128xf32, #tpu.memory_space<vmem>>, vector<8x128xf32>
    tpu.vector_store %arg8[%c0_128, %c0_129], %457 {strides = array<i32>} : memref<8x128xf32, #tpu.memory_space<vmem>>, vector<8x128xf32>,
    return
  }
}

</mosaic_0001>

<llo_original>
// kernel: conditional_sample_fused.1
$region0: #{conditional_sample_fused.1}
  #allocation0 [shape = 'u32[]', space=smem, size = 0x4, offset = 0x4, fixed_abs, tag = 'smem constant byte address 0x4 - core index']
  #allocation1 [shape = 'u32[72,128]{1,0:T(1,128)}', space=vmem, size = 0x9000, scoped, tag = 'internal scratch']
  %s0 = inlined_call_operand.hbm [shape: f32[80], index: 0, kind: input, shape index: {}]
  %s1 = inlined_call_operand.hbm [shape: f32[8,128], index: 1, kind: input, shape index: {}]
  %s2 = inlined_call_operand.hbm [shape: f32[8,128], index: 2, kind: input, shape index: {}]
  %s3 = inlined_call_operand.hbm [shape: f32[10,8,128], index: 3, kind: input, shape index: {}]
  %s4 = inlined_call_operand.hbm [shape: f32[10,1,128], index: 4, kind: input, shape index: {}]
  %s5 = inlined_call_operand.hbm [shape: bf16[128,128], index: 5, kind: input, shape index: {}]
  %s6 = inlined_call_operand.hbm [shape: bf16[128,128], index: 6, kind: input, shape index: {}]
  %s7 = inlined_call_operand.vmem [shape: f32[1,128], index: 7, kind: input, shape index: {}]
  %s8 = inlined_call_operand.hbm [shape: f32[8,128], index: 8, kind: output, shape index: {}]
  %s9 = sld [smem:[#allocation0]]
  $region70: #{conditional_sample_fused.1} parent=0
    _
  %s11 = ssub.s32 1, %s9
  %s12 = scalar_select 0, %s11, %s9
  $region1: #{conditional_sample_fused.1} parent=0
    #allocation2 [shape = 'u8[512]{0}', space=smem, size = 0x200, scoped, tag = 'input window, operand 0, single buffered']
    #allocation3 [shape = 's32[1]{0}', space=sflag, size = 0x4, scoped, tag = 'scoped memory for conditional_sample_fused.1']
    #allocation4 [shape = 's32[1]{0}', space=sflag, size = 0x4, scoped, tag = 'scoped memory for conditional_sample_fused.1']
    #allocation5 [shape = 's32[1]{0}', space=sflag, size = 0x4, scoped, tag = 'scoped memory for conditional_sample_fused.1']
    #allocation6 [shape = 'u8[4096]{0}', space=vmem, size = 0x1000, scoped, tag = 'input window, operand 1, single buffered']
    #allocation7 [shape = 'u8[4096]{0}', space=vmem, size = 0x1000, scoped, tag = 'input window, operand 2, single buffered']
    #allocation8 [shape = 's32[1]{0}', space=sflag, size = 0x4, scoped, tag = 'scoped memory for conditional_sample_fused.1']
    #allocation9 [shape = 'u8[40960]{0}', space=vmem, size = 0xa000, scoped, tag = 'input window, operand 3, single buffered']
    #allocation10 [shape = 'u8[5120]{0}', space=vmem, size = 0x1400, scoped, tag = 'input window, operand 4, single buffered']
    #allocation11 [shape = 's32[1]{0}', space=sflag, size = 0x4, scoped, tag = 'scoped memory for conditional_sample_fused.1']
    #allocation12 [shape = 'u8[32768]{0}', space=vmem, size = 0x8000, scoped, tag = 'input window, operand 5, single buffered']
    #allocation13 [shape = 'u8[32768]{0}', space=vmem, size = 0x8000, scoped, tag = 'input window, operand 6, single buffered']
    #allocation14 [shape = 's32[1]{0}', space=sflag, size = 0x4, scoped, tag = 'scoped memory for conditional_sample_fused.1']
    #allocation15 [shape = 'u8[4096]{0}', space=vmem, size = 0x1000, scoped, tag = 'output window, operand 0, single buffered']
    %13 = vsyncpa [#allocation5], 0
    %14 = vsyncpa [#allocation3], 0
    %15 = vsyncpa [#allocation8], 0
    %16 = vsyncpa [#allocation11], 0
    %17 = vsyncpa [#allocation14], 0
    %18 = vsyncpa [#allocation4], 0
    // Predicated region
    $region2: #{conditional_sample_fused.1} parent=1 // pred_check
      _
    $region3: #{conditional_sample_fused.1} parent=1 // pred_check_branch
      %20 = sbr.rel (0) target = $region5
    $region4: #{conditional_sample_fused.1} parent=1 // pred_region
      %22 = vsyncadd [#allocation5], 0
      %s24 = sshll.u32 %s0, 4
      %s25 = int_to_ptr.hbm [resolvable:$true] %s24
      %27 = dma.hbm_to_smem %s25, 16, [#allocation2], [#allocation5]
    $region5: #{conditional_sample_fused.1} parent=1 // pred_fallthru
      _
    // Predicated region
    $region6: #{conditional_sample_fused.1} parent=1 // pred_check
      _
    $region7: #{conditional_sample_fused.1} parent=1 // pred_check_branch
      %29 = sbr.rel (0) target = $region9
    $region8: #{conditional_sample_fused.1} parent=1 // pred_region
      %31 = vsyncadd [#allocation3], 0
      %s33 = sshll.u32 %s1, 4
      %s34 = int_to_ptr.hbm [resolvable:$true] %s33
      %s35 = sshll.u32 [#allocation6], 4
      %s36 = int_to_ptr.vmem [resolvable:$true] %s35
      %38 = dma.hbm_to_vmem [thread:$0]  %s34, 128, %s36, [#allocation3]
    $region9: #{conditional_sample_fused.1} parent=1 // pred_fallthru
      _
    // Predicated region
    $region10: #{conditional_sample_fused.1} parent=1 // pred_check
      _
    $region11: #{conditional_sample_fused.1} parent=1 // pred_check_branch
      %40 = sbr.rel (0) target = $region13
    $region12: #{conditional_sample_fused.1} parent=1 // pred_region
      %42 = vsyncadd [#allocation8], 0
      %s44 = sshll.u32 %s2, 4
      %s45 = int_to_ptr.hbm [resolvable:$true] %s44
      %s46 = sshll.u32 [#allocation7], 4
      %s47 = int_to_ptr.vmem [resolvable:$true] %s46
      %49 = dma.hbm_to_vmem [thread:$0]  %s45, 128, %s47, [#allocation8]
    $region13: #{conditional_sample_fused.1} parent=1 // pred_fallthru
      _
    // Predicated region
    $region14: #{conditional_sample_fused.1} parent=1 // pred_check
      _
    $region15: #{conditional_sample_fused.1} parent=1 // pred_check_branch
      %51 = sbr.rel (0) target = $region17
    $region16: #{conditional_sample_fused.1} parent=1 // pred_region
      %53 = vsyncadd [#allocation8], 0
      %s54 = sshll.u32 %s3, 4
      %s55 = int_to_ptr.hbm [resolvable:$true] %s54
      %s56 = sshll.u32 [#allocation9], 4
      %s57 = int_to_ptr.vmem [resolvable:$true] %s56
      %62 = dma.hbm_to_vmem [thread:$0]  %s55, 1280, %s57, [#allocation8], 128, 128, 8
    $region17: #{conditional_sample_fused.1} parent=1 // pred_fallthru
      _
    // Predicated region
    $region18: #{conditional_sample_fused.1} parent=1 // pred_check
      _
    $region19: #{conditional_sample_fused.1} parent=1 // pred_check_branch
      %64 = sbr.rel (0) target = $region21
    $region20: #{conditional_sample_fused.1} parent=1 // pred_region
      %66 = vsyncadd [#allocation11], 0
      %s67 = sshll.u32 %s4, 4
      %s68 = int_to_ptr.hbm [resolvable:$true] %s67
      %s69 = sshll.u32 [#allocation10], 4
      %s70 = int_to_ptr.vmem [resolvable:$true] %s69
      %75 = dma.hbm_to_vmem [thread:$0]  %s68, 160, %s70, [#allocation11], 16, 16, 1
    $region21: #{conditional_sample_fused.1} parent=1 // pred_fallthru
      _
    // Predicated region
    $region22: #{conditional_sample_fused.1} parent=1 // pred_check
      _
    $region23: #{conditional_sample_fused.1} parent=1 // pred_check_branch
      %77 = sbr.rel (0) target = $region25
    $region24: #{conditional_sample_fused.1} parent=1 // pred_region
      %79 = vsyncadd [#allocation11], 0
      %s80 = sshll.u32 %s5, 4
      %s81 = int_to_ptr.hbm [resolvable:$true] %s80
      %s82 = sshll.u32 [#allocation12], 4
      %s83 = int_to_ptr.vmem [resolvable:$true] %s82
      %88 = dma.hbm_to_vmem [thread:$0]  %s81, 1024, %s83, [#allocation11], 64, 64, 4
    $region25: #{conditional_sample_fused.1} parent=1 // pred_fallthru
      _
    // Predicated region
    $region26: #{conditional_sample_fused.1} parent=1 // pred_check
      _
    $region27: #{conditional_sample_fused.1} parent=1 // pred_check_branch
      %90 = sbr.rel (0) target = $region29
    $region28: #{conditional_sample_fused.1} parent=1 // pred_region
      %92 = vsyncadd [#allocation14], 0
      %s93 = sshll.u32 %s6, 4
      %s94 = int_to_ptr.hbm [resolvable:$true] %s93
      %s95 = sshll.u32 [#allocation13], 4
      %s96 = int_to_ptr.vmem [resolvable:$true] %s95
      %101 = dma.hbm_to_vmem [thread:$0]  %s94, 1024, %s96, [#allocation14], 64, 64, 4
    $region29: #{conditional_sample_fused.1} parent=1 // pred_fallthru
      _
    // Predicated region
    $region30: #{conditional_sample_fused.1} parent=1 // pred_check
      _
    $region31: #{conditional_sample_fused.1} parent=1 // pred_check_branch
      %103 = sbr.rel (0) target = $region33
    $region32: #{conditional_sample_fused.1} parent=1 // pred_region
      _
    $region33: #{conditional_sample_fused.1} parent=1 // pred_fallthru
      _
    // Predicated region
    $region34: #{conditional_sample_fused.1} parent=1 // pred_check
      _
    $region35: #{conditional_sample_fused.1} parent=1 // pred_check_branch
      %105 = sbr.rel (0) target = $region37
    $region36: #{conditional_sample_fused.1} parent=1 // pred_region
      %107 = dma.done [#allocation5], 16
    $region37: #{conditional_sample_fused.1} parent=1 // pred_fallthru
      _
    // Predicated region
    $region38: #{conditional_sample_fused.1} parent=1 // pred_check
      _
    $region39: #{conditional_sample_fused.1} parent=1 // pred_check_branch
      %109 = sbr.rel (0) target = $region41
    $region40: #{conditional_sample_fused.1} parent=1 // pred_region
      %111 = dma.done [#allocation3], 128
    $region41: #{conditional_sample_fused.1} parent=1 // pred_fallthru
      _
    // Predicated region
    $region42: #{conditional_sample_fused.1} parent=1 // pred_check
      _
    $region43: #{conditional_sample_fused.1} parent=1 // pred_check_branch
      %113 = sbr.rel (0) target = $region45
    $region44: #{conditional_sample_fused.1} parent=1 // pred_region
      %115 = dma.done [#allocation8], 128
    $region45: #{conditional_sample_fused.1} parent=1 // pred_fallthru
      _
    // Predicated region
    $region46: #{conditional_sample_fused.1} parent=1 // pred_check
      _
    $region47: #{conditional_sample_fused.1} parent=1 // pred_check_branch
      %117 = sbr.rel (0) target = $region49
    $region48: #{conditional_sample_fused.1} parent=1 // pred_region
      %119 = dma.done [#allocation8], 1280
    $region49: #{conditional_sample_fused.1} parent=1 // pred_fallthru
      _
    // Predicated region
    $region50: #{conditional_sample_fused.1} parent=1 // pred_check
      _
    $region51: #{conditional_sample_fused.1} parent=1 // pred_check_branch
      %121 = sbr.rel (0) target = $region53
    $region52: #{conditional_sample_fused.1} parent=1 // pred_region
      %123 = dma.done [#allocation11], 160
    $region53: #{conditional_sample_fused.1} parent=1 // pred_fallthru
      _
    // Predicated region
    $region54: #{conditional_sample_fused.1} parent=1 // pred_check
      _
    $region55: #{conditional_sample_fused.1} parent=1 // pred_check_branch
      %125 = sbr.rel (0) target = $region57
    $region56: #{conditional_sample_fused.1} parent=1 // pred_region
      %127 = dma.done [#allocation11], 1024
    $region57: #{conditional_sample_fused.1} parent=1 // pred_fallthru
      _
    // Predicated region
    $region58: #{conditional_sample_fused.1} parent=1 // pred_check
      _
    $region59: #{conditional_sample_fused.1} parent=1 // pred_check_branch
      %129 = sbr.rel (0) target = $region61
    $region60: #{conditional_sample_fused.1} parent=1 // pred_region
      %131 = dma.done [#allocation14], 1024
    $region61: #{conditional_sample_fused.1} parent=1 // pred_fallthru
      _
    %132 = sfence
    %v133 = vlaneseq
    %v134 = vand.u32 %v133, 127
    %vm135 = vcmp.lt.s32.totalorder %v134, 12
    %v136 = vld [vmem:[#allocation7] sm:$0xff]
    %v137 = vld [vmem:[#allocation12] sm:$0xf]
    %v138 = vld [vmem:[#allocation12 + $0x4] sm:$0xf]
    %v139 = vld [vmem:[#allocation12 + $0x8] sm:$0xf]
    %v140 = vld [vmem:[#allocation12 + $0xc] sm:$0xf]
    %v141 = vld [vmem:[#allocation12 + $0x10] sm:$0xf]
    %v142 = vld [vmem:[#allocation12 + $0x14] sm:$0xf]
    %v143 = vld [vmem:[#allocation12 + $0x18] sm:$0xf]
    %v144 = vld [vmem:[#allocation12 + $0x1c] sm:$0xf]
    %v145 = vld [vmem:[#allocation12 + $0x20] sm:$0xf]
    %v146 = vld [vmem:[#allocation12 + $0x24] sm:$0xf]
    %v147 = vld [vmem:[#allocation12 + $0x28] sm:$0xf]
    %v148 = vld [vmem:[#allocation12 + $0x2c] sm:$0xf]
    %v149 = vld [vmem:[#allocation12 + $0x30] sm:$0xf]
    %v150 = vld [vmem:[#allocation12 + $0x34] sm:$0xf]
    %v151 = vld [vmem:[#allocation12 + $0x38] sm:$0xf]
    %v152 = vld [vmem:[#allocation12 + $0x3c] sm:$0xf]
    %v153 = vld [vmem:[#allocation13] sm:$0xf]
    %v154 = vld [vmem:[#allocation13 + $0x4] sm:$0xf]
    %v155 = vld [vmem:[#allocation13 + $0x8] sm:$0xf]
    %v156 = vld [vmem:[#allocation13 + $0xc] sm:$0xf]
    %v157 = vld [vmem:[#allocation13 + $0x10] sm:$0xf]
    %v158 = vld [vmem:[#allocation13 + $0x14] sm:$0xf]
    %v159 = vld [vmem:[#allocation13 + $0x18] sm:$0xf]
    %v160 = vld [vmem:[#allocation13 + $0x1c] sm:$0xf]
    %v161 = vld [vmem:[#allocation13 + $0x20] sm:$0xf]
    %v162 = vld [vmem:[#allocation13 + $0x24] sm:$0xf]
    %v163 = vld [vmem:[#allocation13 + $0x28] sm:$0xf]
    %v164 = vld [vmem:[#allocation13 + $0x2c] sm:$0xf]
    %v165 = vld [vmem:[#allocation13 + $0x30] sm:$0xf]
    %v166 = vld [vmem:[#allocation13 + $0x34] sm:$0xf]
    %v167 = vld [vmem:[#allocation13 + $0x38] sm:$0xf]
    %v168 = vld [vmem:[#allocation13 + $0x3c] sm:$0xf]
    %v169 = vld [vmem:[%s7] sm:$0x1]
    %v170 = vld [vmem:[#allocation6] sm:$0xff]
    %s171 = sld [smem:[#allocation2]]
    %s172 = sld [smem:[#allocation2 + $0x1]]
    %s173 = sld [smem:[#allocation2 + $0x2]]
    %s174 = sld [smem:[#allocation2 + $0x3]]
    %s175 = sld [smem:[#allocation2 + $0x4]]
    %v176 = vpack.c.bf16 %v170, %v170
    %v177 = vld [vmem:[#allocation10] sm:$0x1]
    %v179 = vperm.slane %v177, 0
    %v197 = vunpack.c.l.b16 %v137
    %v198 = vunpack.c.l.b16 %v138
    %v199 = vunpack.c.l.b16 %v139
    %v200 = vunpack.c.l.b16 %v140
    %v201 = vunpack.c.l.b16 %v141
    %v202 = vunpack.c.l.b16 %v142
    %v203 = vunpack.c.l.b16 %v143
    %v204 = vunpack.c.l.b16 %v144
    %v205 = vunpack.c.l.b16 %v145
    %v206 = vunpack.c.l.b16 %v146
    %v207 = vunpack.c.l.b16 %v147
    %v208 = vunpack.c.l.b16 %v148
    %v209 = vunpack.c.l.b16 %v149
    %v210 = vunpack.c.l.b16 %v150
    %v211 = vunpack.c.l.b16 %v151
    %v212 = vunpack.c.l.b16 %v152
    %v213 = vpack.c.b16 %v198, %v197
    %v214 = vpack.c.b16 %v200, %v199
    %v215 = vpack.c.b16 %v202, %v201
    %v216 = vpack.c.b16 %v204, %v203
    %v217 = vpack.c.b16 %v206, %v205
    %v218 = vpack.c.b16 %v208, %v207
    %v219 = vpack.c.b16 %v210, %v209
    %v220 = vpack.c.b16 %v212, %v211
    %229 = vmatpush.bf16.msra.mxu0 %v220
    %230 = vmatpush.bf16.msra.mxu0 %v219
    %231 = vmatpush.bf16.msra.mxu0 %v218
    %232 = vmatpush.bf16.msra.mxu0 %v217
    %233 = vmatpush.bf16.msra.mxu0 %v216
    %234 = vmatpush.bf16.msra.mxu0 %v215
    %235 = vmatpush.bf16.msra.mxu0 %v214
    %236 = vmatpush.bf16.msra.mxu0 %v213
    %237 = vmatmul.bf16.gmra.mxu0 %v176
    %v238 = vpop.f32.mrf.mxu0
    %v239 = vadd.f32 %v179, %v238
    %v240 = vpop.f32.mrf.mxu0
    %241 = vdwg.mxu0
    %v242 = vtanh.pop %v239
    %v243 = vpack.c.bf16 %v242, %v242
    %v245 = vperm.slane %v169, 0
    %v263 = vunpack.c.l.b16 %v153
    %v264 = vunpack.c.l.b16 %v154
    %v265 = vunpack.c.l.b16 %v155
    %v266 = vunpack.c.l.b16 %v156
    %v267 = vunpack.c.l.b16 %v157
    %v268 = vunpack.c.l.b16 %v158
    %v269 = vunpack.c.l.b16 %v159
    %v270 = vunpack.c.l.b16 %v160
    %v271 = vunpack.c.l.b16 %v161
    %v272 = vunpack.c.l.b16 %v162
    %v273 = vunpack.c.l.b16 %v163
    %v274 = vunpack.c.l.b16 %v164
    %v275 = vunpack.c.l.b16 %v165
    %v276 = vunpack.c.l.b16 %v166
    %v277 = vunpack.c.l.b16 %v167
    %v278 = vunpack.c.l.b16 %v168
    %v279 = vpack.c.b16 %v264, %v263
    %v280 = vpack.c.b16 %v266, %v265
    %v281 = vpack.c.b16 %v268, %v267
    %v282 = vpack.c.b16 %v270, %v269
    %v283 = vpack.c.b16 %v272, %v271
    %v284 = vpack.c.b16 %v274, %v273
    %v285 = vpack.c.b16 %v276, %v275
    %v286 = vpack.c.b16 %v278, %v277
    %295 = vmatpush.bf16.msra.mxu0 %v286
    %296 = vmatpush.bf16.msra.mxu0 %v285
    %297 = vmatpush.bf16.msra.mxu0 %v284
    %298 = vmatpush.bf16.msra.mxu0 %v283
    %299 = vmatpush.bf16.msra.mxu0 %v282
    %300 = vmatpush.bf16.msra.mxu0 %v281
    %301 = vmatpush.bf16.msra.mxu0 %v280
    %302 = vmatpush.bf16.msra.mxu0 %v279
    %303 = vmatmul.bf16.gmra.mxu0 %v243
    %v304 = vpop.f32.mrf.mxu0
    %v305 = vadd.f32 %v245, %v304
    %v306 = vpop.f32.mrf.mxu0
    %307 = vdwg.mxu0
    %v308 = vstv %s171
    %v309 = vmul.f32 %v308, %v170
    %v310 = vstv %s172
    %v311 = vmul.f32 %v310, %v305
    %v312 = vsub.f32 %v309, %v311
    %v313 = vstv %s173
    %v314 = vmul.f32 %v313, %v312
    %v315 = vstv %s174
    %v316 = vmul.f32 %v315, %v170
    %v317 = vadd.f32 %v314, %v316
    %v318 = vld [vmem:[#allocation9] sm:$0xff]
    %v319 = vstv %s175
    %v320 = vmul.f32 %v319, %v318
    %v321 = vadd.f32 %v317, %v320
    %v322 = vsel %vm135, %v136, %v321
    %s323 = sld [smem:[#allocation2 + $0x8]]
    %s324 = sld [smem:[#allocation2 + $0x9]]
    %s325 = sld [smem:[#allocation2 + $0xa]]
    %s326 = sld [smem:[#allocation2 + $0xb]]
    %s327 = sld [smem:[#allocation2 + $0xc]]
    %v328 = vpack.c.bf16 %v322, %v322
    %s329 = scalar_lea.vmem [#allocation10], 1
    %v330 = vld [vmem:[%s329] sm:$0x1]
    %v332 = vperm.slane %v330, 0
    %334 = vmatpush.bf16.msra.mxu0 %v220
    %335 = vmatpush.bf16.msra.mxu0 %v219
    %336 = vmatpush.bf16.msra.mxu0 %v218
    %337 = vmatpush.bf16.msra.mxu0 %v217
    %338 = vmatpush.bf16.msra.mxu0 %v216
    %339 = vmatpush.bf16.msra.mxu0 %v215
    %340 = vmatpush.bf16.msra.mxu0 %v214
    %341 = vmatpush.bf16.msra.mxu0 %v213
    %342 = vmatmul.bf16.gmra.mxu0 %v328
    %v343 = vpop.f32.mrf.mxu0
    %v344 = vadd.f32 %v332, %v343
    %v345 = vpop.f32.mrf.mxu0
    %346 = vdwg.mxu0
    %v347 = vtanh.pop %v344
    %v348 = vpack.c.bf16 %v347, %v347
    %349 = vmatpush.bf16.msra.mxu0 %v286
    %350 = vmatpush.bf16.msra.mxu0 %v285
    %351 = vmatpush.bf16.msra.mxu0 %v284
    %352 = vmatpush.bf16.msra.mxu0 %v283
    %353 = vmatpush.bf16.msra.mxu0 %v282
    %354 = vmatpush.bf16.msra.mxu0 %v281
    %355 = vmatpush.bf16.msra.mxu0 %v280
    %356 = vmatpush.bf16.msra.mxu0 %v279
    %357 = vmatmul.bf16.gmra.mxu0 %v348
    %v358 = vpop.f32.mrf.mxu0
    %v359 = vadd.f32 %v245, %v358
    %v360 = vpop.f32.mrf.mxu0
    %361 = vdwg.mxu0
    %v362 = vstv %s323
    %v363 = vmul.f32 %v362, %v322
    %v364 = vstv %s324
    %v365 = vmul.f32 %v364, %v359
    %v366 = vsub.f32 %v363, %v365
    %v367 = vstv %s325
    %v368 = vmul.f32 %v367, %v366
    %v369 = vstv %s326
    %v370 = vmul.f32 %v369, %v322
    %v371 = vadd.f32 %v368, %v370
    %s372 = scalar_lea.vmem [#allocation9], 8
    %v373 = vld [vmem:[%s372] sm:$0xff]
    %v374 = vstv %s327
    %v375 = vmul.f32 %v374, %v373
    %v376 = vadd.f32 %v371, %v375
    %v377 = vsel %vm135, %v136, %v376
    %s378 = sld [smem:[#allocation2 + $0x10]]
    %s379 = sld [smem:[#allocation2 + $0x11]]
    %s380 = sld [smem:[#allocation2 + $0x12]]
    %s381 = sld [smem:[#allocation2 + $0x13]]
    %s382 = sld [smem:[#allocation2 + $0x14]]
    %v383 = vpack.c.bf16 %v377, %v377
    %s384 = scalar_lea.vmem [#allocation10], 2
    %v385 = vld [vmem:[%s384] sm:$0x1]
    %v387 = vperm.slane %v385, 0
    %389 = vmatpush.bf16.msra.mxu0 %v220
    %390 = vmatpush.bf16.msra.mxu0 %v219
    %391 = vmatpush.bf16.msra.mxu0 %v218
    %392 = vmatpush.bf16.msra.mxu0 %v217
    %393 = vmatpush.bf16.msra.mxu0 %v216
    %394 = vmatpush.bf16.msra.mxu0 %v215
    %395 = vmatpush.bf16.msra.mxu0 %v214
    %396 = vmatpush.bf16.msra.mxu0 %v213
    %397 = vmatmul.bf16.gmra.mxu0 %v383
    %v398 = vpop.f32.mrf.mxu0
    %v399 = vadd.f32 %v387, %v398
    %v400 = vpop.f32.mrf.mxu0
    %401 = vdwg.mxu0
    %v402 = vtanh.pop %v399
    %v403 = vpack.c.bf16 %v402, %v402
    %404 = vmatpush.bf16.msra.mxu0 %v286
    %405 = vmatpush.bf16.msra.mxu0 %v285
    %406 = vmatpush.bf16.msra.mxu0 %v284
    %407 = vmatpush.bf16.msra.mxu0 %v283
    %408 = vmatpush.bf16.msra.mxu0 %v282
    %409 = vmatpush.bf16.msra.mxu0 %v281
    %410 = vmatpush.bf16.msra.mxu0 %v280
    %411 = vmatpush.bf16.msra.mxu0 %v279
    %412 = vmatmul.bf16.gmra.mxu0 %v403
    %v413 = vpop.f32.mrf.mxu0
    %v414 = vadd.f32 %v245, %v413
    %v415 = vpop.f32.mrf.mxu0
    %416 = vdwg.mxu0
    %v417 = vstv %s378
    %v418 = vmul.f32 %v417, %v377
    %v419 = vstv %s379
    %v420 = vmul.f32 %v419, %v414
    %v421 = vsub.f32 %v418, %v420
    %v422 = vstv %s380
    %v423 = vmul.f32 %v422, %v421
    %v424 = vstv %s381
    %v425 = vmul.f32 %v424, %v377
    %v426 = vadd.f32 %v423, %v425
    %s427 = scalar_lea.vmem [#allocation9], 16
    %v428 = vld [vmem:[%s427] sm:$0xff]
    %v429 = vstv %s382
    %v430 = vmul.f32 %v429, %v428
    %v431 = vadd.f32 %v426, %v430
    %v432 = vsel %vm135, %v136, %v431
    %s433 = sld [smem:[#allocation2 + $0x18]]
    %s434 = sld [smem:[#allocation2 + $0x19]]
    %s435 = sld [smem:[#allocation2 + $0x1a]]
    %s436 = sld [smem:[#allocation2 + $0x1b]]
    %s437 = sld [smem:[#allocation2 + $0x1c]]
    %v438 = vpack.c.bf16 %v432, %v432
    %s439 = scalar_lea.vmem [#allocation10], 3
    %v440 = vld [vmem:[%s439] sm:$0x1]
    %v442 = vperm.slane %v440, 0
    %444 = vmatpush.bf16.msra.mxu0 %v220
    %445 = vmatpush.bf16.msra.mxu0 %v219
    %446 = vmatpush.bf16.msra.mxu0 %v218
    %447 = vmatpush.bf16.msra.mxu0 %v217
    %448 = vmatpush.bf16.msra.mxu0 %v216
    %449 = vmatpush.bf16.msra.mxu0 %v215
    %450 = vmatpush.bf16.msra.mxu0 %v214
    %451 = vmatpush.bf16.msra.mxu0 %v213
    %452 = vmatmul.bf16.gmra.mxu0 %v438
    %v453 = vpop.f32.mrf.mxu0
    %v454 = vadd.f32 %v442, %v453
    %v455 = vpop.f32.mrf.mxu0
    %456 = vdwg.mxu0
    %v457 = vtanh.pop %v454
    %v458 = vpack.c.bf16 %v457, %v457
    %459 = vmatpush.bf16.msra.mxu0 %v286
    %460 = vmatpush.bf16.msra.mxu0 %v285
    %461 = vmatpush.bf16.msra.mxu0 %v284
    %462 = vmatpush.bf16.msra.mxu0 %v283
    %463 = vmatpush.bf16.msra.mxu0 %v282
    %464 = vmatpush.bf16.msra.mxu0 %v281
    %465 = vmatpush.bf16.msra.mxu0 %v280
    %466 = vmatpush.bf16.msra.mxu0 %v279
    %467 = vmatmul.bf16.gmra.mxu0 %v458
    %v468 = vpop.f32.mrf.mxu0
    %v469 = vadd.f32 %v245, %v468
    %v470 = vpop.f32.mrf.mxu0
    %471 = vdwg.mxu0
    %v472 = vstv %s433
    %v473 = vmul.f32 %v472, %v432
    %v474 = vstv %s434
    %v475 = vmul.f32 %v474, %v469
    %v476 = vsub.f32 %v473, %v475
    %v477 = vstv %s435
    %v478 = vmul.f32 %v477, %v476
    %v479 = vstv %s436
    %v480 = vmul.f32 %v479, %v432
    %v481 = vadd.f32 %v478, %v480
    %s482 = scalar_lea.vmem [#allocation9], 24
    %v483 = vld [vmem:[%s482] sm:$0xff]
    %v484 = vstv %s437
    %v485 = vmul.f32 %v484, %v483
    %v486 = vadd.f32 %v481, %v485
    %v487 = vsel %vm135, %v136, %v486
    %s488 = sld [smem:[#allocation2 + $0x20]]
    %s489 = sld [smem:[#allocation2 + $0x21]]
    %s490 = sld [smem:[#allocation2 + $0x22]]
    %s491 = sld [smem:[#allocation2 + $0x23]]
    %s492 = sld [smem:[#allocation2 + $0x24]]
    %v493 = vpack.c.bf16 %v487, %v487
    %s494 = scalar_lea.vmem [#allocation10], 4
    %v495 = vld [vmem:[%s494] sm:$0x1]
    %v497 = vperm.slane %v495, 0
    %499 = vmatpush.bf16.msra.mxu0 %v220
    %500 = vmatpush.bf16.msra.mxu0 %v219
    %501 = vmatpush.bf16.msra.mxu0 %v218
    %502 = vmatpush.bf16.msra.mxu0 %v217
    %503 = vmatpush.bf16.msra.mxu0 %v216
    %504 = vmatpush.bf16.msra.mxu0 %v215
    %505 = vmatpush.bf16.msra.mxu0 %v214
    %506 = vmatpush.bf16.msra.mxu0 %v213
    %507 = vmatmul.bf16.gmra.mxu0 %v493
    %v508 = vpop.f32.mrf.mxu0
    %v509 = vadd.f32 %v497, %v508
    %v510 = vpop.f32.mrf.mxu0
    %511 = vdwg.mxu0
    %v512 = vtanh.pop %v509
    %v513 = vpack.c.bf16 %v512, %v512
    %514 = vmatpush.bf16.msra.mxu0 %v286
    %515 = vmatpush.bf16.msra.mxu0 %v285
    %516 = vmatpush.bf16.msra.mxu0 %v284
    %517 = vmatpush.bf16.msra.mxu0 %v283
    %518 = vmatpush.bf16.msra.mxu0 %v282
    %519 = vmatpush.bf16.msra.mxu0 %v281
    %520 = vmatpush.bf16.msra.mxu0 %v280
    %521 = vmatpush.bf16.msra.mxu0 %v279
    %522 = vmatmul.bf16.gmra.mxu0 %v513
    %v523 = vpop.f32.mrf.mxu0
    %v524 = vadd.f32 %v245, %v523
    %v525 = vpop.f32.mrf.mxu0
    %526 = vdwg.mxu0
    %v527 = vstv %s488
    %v528 = vmul.f32 %v527, %v487
    %v529 = vstv %s489
    %v530 = vmul.f32 %v529, %v524
    %v531 = vsub.f32 %v528, %v530
    %v532 = vstv %s490
    %v533 = vmul.f32 %v532, %v531
    %v534 = vstv %s491
    %v535 = vmul.f32 %v534, %v487
    %v536 = vadd.f32 %v533, %v535
    %s537 = scalar_lea.vmem [#allocation9], 32
    %v538 = vld [vmem:[%s537] sm:$0xff]
    %v539 = vstv %s492
    %v540 = vmul.f32 %v539, %v538
    %v541 = vadd.f32 %v536, %v540
    %v542 = vsel %vm135, %v136, %v541
    %s543 = sld [smem:[#allocation2 + $0x28]]
    %s544 = sld [smem:[#allocation2 + $0x29]]
    %s545 = sld [smem:[#allocation2 + $0x2a]]
    %s546 = sld [smem:[#allocation2 + $0x2b]]
    %s547 = sld [smem:[#allocation2 + $0x2c]]
    %v548 = vpack.c.bf16 %v542, %v542
    %s549 = scalar_lea.vmem [#allocation10], 5
    %v550 = vld [vmem:[%s549] sm:$0x1]
    %v552 = vperm.slane %v550, 0
    %554 = vmatpush.bf16.msra.mxu0 %v220
    %555 = vmatpush.bf16.msra.mxu0 %v219
    %556 = vmatpush.bf16.msra.mxu0 %v218
    %557 = vmatpush.bf16.msra.mxu0 %v217
    %558 = vmatpush.bf16.msra.mxu0 %v216
    %559 = vmatpush.bf16.msra.mxu0 %v215
    %560 = vmatpush.bf16.msra.mxu0 %v214
    %561 = vmatpush.bf16.msra.mxu0 %v213
    %562 = vmatmul.bf16.gmra.mxu0 %v548
    %v563 = vpop.f32.mrf.mxu0
    %v564 = vadd.f32 %v552, %v563
    %v565 = vpop.f32.mrf.mxu0
    %566 = vdwg.mxu0
    %v567 = vtanh.pop %v564
    %v568 = vpack.c.bf16 %v567, %v567
    %569 = vmatpush.bf16.msra.mxu0 %v286
    %570 = vmatpush.bf16.msra.mxu0 %v285
    %571 = vmatpush.bf16.msra.mxu0 %v284
    %572 = vmatpush.bf16.msra.mxu0 %v283
    %573 = vmatpush.bf16.msra.mxu0 %v282
    %574 = vmatpush.bf16.msra.mxu0 %v281
    %575 = vmatpush.bf16.msra.mxu0 %v280
    %576 = vmatpush.bf16.msra.mxu0 %v279
    %577 = vmatmul.bf16.gmra.mxu0 %v568
    %v578 = vpop.f32.mrf.mxu0
    %v579 = vadd.f32 %v245, %v578
    %v580 = vpop.f32.mrf.mxu0
    %581 = vdwg.mxu0
    %v582 = vstv %s543
    %v583 = vmul.f32 %v582, %v542
    %v584 = vstv %s544
    %v585 = vmul.f32 %v584, %v579
    %v586 = vsub.f32 %v583, %v585
    %v587 = vstv %s545
    %v588 = vmul.f32 %v587, %v586
    %v589 = vstv %s546
    %v590 = vmul.f32 %v589, %v542
    %v591 = vadd.f32 %v588, %v590
    %s592 = scalar_lea.vmem [#allocation9], 40
    %v593 = vld [vmem:[%s592] sm:$0xff]
    %v594 = vstv %s547
    %v595 = vmul.f32 %v594, %v593
    %v596 = vadd.f32 %v591, %v595
    %v597 = vsel %vm135, %v136, %v596
    %s598 = sld [smem:[#allocation2 + $0x30]]
    %s599 = sld [smem:[#allocation2 + $0x31]]
    %s600 = sld [smem:[#allocation2 + $0x32]]
    %s601 = sld [smem:[#allocation2 + $0x33]]
    %s602 = sld [smem:[#allocation2 + $0x34]]
    %v603 = vpack.c.bf16 %v597, %v597
    %s604 = scalar_lea.vmem [#allocation10], 6
    %v605 = vld [vmem:[%s604] sm:$0x1]
    %v607 = vperm.slane %v605, 0
    %609 = vmatpush.bf16.msra.mxu0 %v220
    %610 = vmatpush.bf16.msra.mxu0 %v219
    %611 = vmatpush.bf16.msra.mxu0 %v218
    %612 = vmatpush.bf16.msra.mxu0 %v217
    %613 = vmatpush.bf16.msra.mxu0 %v216
    %614 = vmatpush.bf16.msra.mxu0 %v215
    %615 = vmatpush.bf16.msra.mxu0 %v214
    %616 = vmatpush.bf16.msra.mxu0 %v213
    %617 = vmatmul.bf16.gmra.mxu0 %v603
    %v618 = vpop.f32.mrf.mxu0
    %v619 = vadd.f32 %v607, %v618
    %v620 = vpop.f32.mrf.mxu0
    %621 = vdwg.mxu0
    %v622 = vtanh.pop %v619
    %v623 = vpack.c.bf16 %v622, %v622
    %624 = vmatpush.bf16.msra.mxu0 %v286
    %625 = vmatpush.bf16.msra.mxu0 %v285
    %626 = vmatpush.bf16.msra.mxu0 %v284
    %627 = vmatpush.bf16.msra.mxu0 %v283
    %628 = vmatpush.bf16.msra.mxu0 %v282
    %629 = vmatpush.bf16.msra.mxu0 %v281
    %630 = vmatpush.bf16.msra.mxu0 %v280
    %631 = vmatpush.bf16.msra.mxu0 %v279
    %632 = vmatmul.bf16.gmra.mxu0 %v623
    %v633 = vpop.f32.mrf.mxu0
    %v634 = vadd.f32 %v245, %v633
    %v635 = vpop.f32.mrf.mxu0
    %636 = vdwg.mxu0
    %v637 = vstv %s598
    %v638 = vmul.f32 %v637, %v597
    %v639 = vstv %s599
    %v640 = vmul.f32 %v639, %v634
    %v641 = vsub.f32 %v638, %v640
    %v642 = vstv %s600
    %v643 = vmul.f32 %v642, %v641
    %v644 = vstv %s601
    %v645 = vmul.f32 %v644, %v597
    %v646 = vadd.f32 %v643, %v645
    %s647 = scalar_lea.vmem [#allocation9], 48
    %v648 = vld [vmem:[%s647] sm:$0xff]
    %v649 = vstv %s602
    %v650 = vmul.f32 %v649, %v648
    %v651 = vadd.f32 %v646, %v650
    %v652 = vsel %vm135, %v136, %v651
    %s653 = sld [smem:[#allocation2 + $0x38]]
    %s654 = sld [smem:[#allocation2 + $0x39]]
    %s655 = sld [smem:[#allocation2 + $0x3a]]
    %s656 = sld [smem:[#allocation2 + $0x3b]]
    %s657 = sld [smem:[#allocation2 + $0x3c]]
    %v658 = vpack.c.bf16 %v652, %v652
    %s659 = scalar_lea.vmem [#allocation10], 7
    %v660 = vld [vmem:[%s659] sm:$0x1]
    %v662 = vperm.slane %v660, 0
    %664 = vmatpush.bf16.msra.mxu0 %v220
    %665 = vmatpush.bf16.msra.mxu0 %v219
    %666 = vmatpush.bf16.msra.mxu0 %v218
    %667 = vmatpush.bf16.msra.mxu0 %v217
    %668 = vmatpush.bf16.msra.mxu0 %v216
    %669 = vmatpush.bf16.msra.mxu0 %v215
    %670 = vmatpush.bf16.msra.mxu0 %v214
    %671 = vmatpush.bf16.msra.mxu0 %v213
    %672 = vmatmul.bf16.gmra.mxu0 %v658
    %v673 = vpop.f32.mrf.mxu0
    %v674 = vadd.f32 %v662, %v673
    %v675 = vpop.f32.mrf.mxu0
    %676 = vdwg.mxu0
    %v677 = vtanh.pop %v674
    %v678 = vpack.c.bf16 %v677, %v677
    %679 = vmatpush.bf16.msra.mxu0 %v286
    %680 = vmatpush.bf16.msra.mxu0 %v285
    %681 = vmatpush.bf16.msra.mxu0 %v284
    %682 = vmatpush.bf16.msra.mxu0 %v283
    %683 = vmatpush.bf16.msra.mxu0 %v282
    %684 = vmatpush.bf16.msra.mxu0 %v281
    %685 = vmatpush.bf16.msra.mxu0 %v280
    %686 = vmatpush.bf16.msra.mxu0 %v279
    %687 = vmatmul.bf16.gmra.mxu0 %v678
    %v688 = vpop.f32.mrf.mxu0
    %v689 = vadd.f32 %v245, %v688
    %v690 = vpop.f32.mrf.mxu0
    %691 = vdwg.mxu0
    %v692 = vstv %s653
    %v693 = vmul.f32 %v692, %v652
    %v694 = vstv %s654
    %v695 = vmul.f32 %v694, %v689
    %v696 = vsub.f32 %v693, %v695
    %v697 = vstv %s655
    %v698 = vmul.f32 %v697, %v696
    %v699 = vstv %s656
    %v700 = vmul.f32 %v699, %v652
    %v701 = vadd.f32 %v698, %v700
    %s702 = scalar_lea.vmem [#allocation9], 56
    %v703 = vld [vmem:[%s702] sm:$0xff]
    %v704 = vstv %s657
    %v705 = vmul.f32 %v704, %v703
    %v706 = vadd.f32 %v701, %v705
    %v707 = vsel %vm135, %v136, %v706
    %s708 = sld [smem:[#allocation2 + $0x40]]
    %s709 = sld [smem:[#allocation2 + $0x41]]
    %s710 = sld [smem:[#allocation2 + $0x42]]
    %s711 = sld [smem:[#allocation2 + $0x43]]
    %s712 = sld [smem:[#allocation2 + $0x44]]
    %v713 = vpack.c.bf16 %v707, %v707
    %s714 = scalar_lea.vmem [#allocation10], 8
    %v715 = vld [vmem:[%s714] sm:$0x1]
    %v717 = vperm.slane %v715, 0
    %719 = vmatpush.bf16.msra.mxu0 %v220
    %720 = vmatpush.bf16.msra.mxu0 %v219
    %721 = vmatpush.bf16.msra.mxu0 %v218
    %722 = vmatpush.bf16.msra.mxu0 %v217
    %723 = vmatpush.bf16.msra.mxu0 %v216
    %724 = vmatpush.bf16.msra.mxu0 %v215
    %725 = vmatpush.bf16.msra.mxu0 %v214
    %726 = vmatpush.bf16.msra.mxu0 %v213
    %727 = vmatmul.bf16.gmra.mxu0 %v713
    %v728 = vpop.f32.mrf.mxu0
    %v729 = vadd.f32 %v717, %v728
    %v730 = vpop.f32.mrf.mxu0
    %731 = vdwg.mxu0
    %v732 = vtanh.pop %v729
    %v733 = vpack.c.bf16 %v732, %v732
    %734 = vmatpush.bf16.msra.mxu0 %v286
    %735 = vmatpush.bf16.msra.mxu0 %v285
    %736 = vmatpush.bf16.msra.mxu0 %v284
    %737 = vmatpush.bf16.msra.mxu0 %v283
    %738 = vmatpush.bf16.msra.mxu0 %v282
    %739 = vmatpush.bf16.msra.mxu0 %v281
    %740 = vmatpush.bf16.msra.mxu0 %v280
    %741 = vmatpush.bf16.msra.mxu0 %v279
    %742 = vmatmul.bf16.gmra.mxu0 %v733
    %v743 = vpop.f32.mrf.mxu0
    %v744 = vadd.f32 %v245, %v743
    %v745 = vpop.f32.mrf.mxu0
    %746 = vdwg.mxu0
    %v747 = vstv %s708
    %v748 = vmul.f32 %v747, %v707
    %v749 = vstv %s709
    %v750 = vmul.f32 %v749, %v744
    %v751 = vsub.f32 %v748, %v750
    %v752 = vstv %s710
    %v753 = vmul.f32 %v752, %v751
    %v754 = vstv %s711
    %v755 = vmul.f32 %v754, %v707
    %v756 = vadd.f32 %v753, %v755
    %s757 = scalar_lea.vmem [#allocation9], 64
    %v758 = vld [vmem:[%s757] sm:$0xff]
    %v759 = vstv %s712
    %v760 = vmul.f32 %v759, %v758
    %v761 = vadd.f32 %v756, %v760
    %v762 = vsel %vm135, %v136, %v761
    %s763 = sld [smem:[#allocation2 + $0x48]]
    %s764 = sld [smem:[#allocation2 + $0x49]]
    %s765 = sld [smem:[#allocation2 + $0x4a]]
    %s766 = sld [smem:[#allocation2 + $0x4b]]
    %s767 = sld [smem:[#allocation2 + $0x4c]]
    %v768 = vpack.c.bf16 %v762, %v762
    %s769 = scalar_lea.vmem [#allocation10], 9
    %v770 = vld [vmem:[%s769] sm:$0x1]
    %v772 = vperm.slane %v770, 0
    %774 = vmatpush.bf16.msra.mxu0 %v220
    %775 = vmatpush.bf16.msra.mxu0 %v219
    %776 = vmatpush.bf16.msra.mxu0 %v218
    %777 = vmatpush.bf16.msra.mxu0 %v217
    %778 = vmatpush.bf16.msra.mxu0 %v216
    %779 = vmatpush.bf16.msra.mxu0 %v215
    %780 = vmatpush.bf16.msra.mxu0 %v214
    %781 = vmatpush.bf16.msra.mxu0 %v213
    %782 = vmatmul.bf16.gmra.mxu0 %v768
    %v783 = vpop.f32.mrf.mxu0
    %v784 = vadd.f32 %v772, %v783
    %v785 = vpop.f32.mrf.mxu0
    %786 = vdwg.mxu0
    %v787 = vtanh.pop %v784
    %v788 = vpack.c.bf16 %v787, %v787
    %789 = vmatpush.bf16.msra.mxu0 %v286
    %790 = vmatpush.bf16.msra.mxu0 %v285
    %791 = vmatpush.bf16.msra.mxu0 %v284
    %792 = vmatpush.bf16.msra.mxu0 %v283
    %793 = vmatpush.bf16.msra.mxu0 %v282
    %794 = vmatpush.bf16.msra.mxu0 %v281
    %795 = vmatpush.bf16.msra.mxu0 %v280
    %796 = vmatpush.bf16.msra.mxu0 %v279
    %797 = vmatmul.bf16.gmra.mxu0 %v788
    %v798 = vpop.f32.mrf.mxu0
    %v799 = vadd.f32 %v245, %v798
    %v800 = vpop.f32.mrf.mxu0
    %801 = vdwg.mxu0
    %v802 = vstv %s763
    %v803 = vmul.f32 %v802, %v762
    %v804 = vstv %s764
    %v805 = vmul.f32 %v804, %v799
    %v806 = vsub.f32 %v803, %v805
    %v807 = vstv %s765
    %v808 = vmul.f32 %v807, %v806
    %v809 = vstv %s766
    %v810 = vmul.f32 %v809, %v762
    %v811 = vadd.f32 %v808, %v810
    %s812 = scalar_lea.vmem [#allocation9], 72
    %v813 = vld [vmem:[%s812] sm:$0xff]
    %v814 = vstv %s767
    %v815 = vmul.f32 %v814, %v813
    %v816 = vadd.f32 %v811, %v815
    %v817 = vsel %vm135, %v136, %v816
    %818 = vst [vmem:[#allocation15] sm:$0xff] %v817
    // Predicated region
    $region62: #{conditional_sample_fused.1} parent=1 // pred_check
      _
    $region63: #{conditional_sample_fused.1} parent=1 // pred_check_branch
      %820 = sbr.rel (0) target = $region65
    $region64: #{conditional_sample_fused.1} parent=1 // pred_region
      %822 = vsyncadd [#allocation4], 0
      %s824 = sshll.u32 [#allocation15], 4
      %s825 = int_to_ptr.vmem [resolvable:$true] %s824
      %s826 = sshll.u32 %s8, 4
      %s827 = int_to_ptr.hbm [resolvable:$true] %s826
      %829 = dma.vmem_to_hbm [thread:$0]  %s825, 128, %s827, [#allocation4]
    $region65: #{conditional_sample_fused.1} parent=1 // pred_fallthru
      _
    // Predicated region
    $region66: #{conditional_sample_fused.1} parent=1 // pred_check
      _
    $region67: #{conditional_sample_fused.1} parent=1 // pred_check_branch
      %831 = sbr.rel (0) target = $region69
    $region68: #{conditional_sample_fused.1} parent=1 // pred_region
      %833 = dma.done [#allocation4], 128
    $region69: #{conditional_sample_fused.1} parent=1 // pred_fallthru
      _
    %834 = vsyncpa [#allocation3], 1
    %835 = vsyncpa [#allocation8], 1
    %836 = vsyncpa [#allocation11], 1
    %837 = vsyncpa [#allocation14], 1
    %838 = vsyncpa [#allocation4], 1
    %839 = vsyncpa [#allocation5], 1

</llo_original>
